<compile_context>
chip_gen: v7x
topology: tpu7x:2x2x1
jax: 0.10.0
libtpu: 0.0.40
codegen_flags: <defaults>
</compile_context>

<pallas_src>
import math

import jax
import jax.numpy as jnp
from jax import lax
from jax.experimental import pallas as pl
from jax.experimental.pallas import tpu as pltpu


def _round_up(n, m):
    return -(-n // m) * m


def _choose_bblk(B, T, target_rows):
    """Sequences per block: rows multiple of 8 when tiled, grid >= 2 whenever possible."""
    align = 8 // math.gcd(T, 8)                # bblk must be a multiple of this when grid > 1
    divs = [d for d in range(1, B + 1) if B % d == 0]
    valid = [d for d in divs if d == B or d % align == 0]
    multi = [d for d in valid if d < B]        # grid >= 2: keeps both v7x TensorCores busy
    pool = multi if multi else valid
    want = max(1, target_rows // T)
    under = [d for d in pool if d <= want]
    return max(under) if under else min(pool)


def _vmem_limit_bytes():
    cap = 128 * 1024 * 1024
    try:
        cap = int(getattr(pltpu.get_tpu_info(), "vmem_capacity_bytes", cap)) or cap
    except Exception:
        pass
    # ~48 MiB on v7x (64 MiB physical per TC), 64 MiB on v5e/v6e (128 MiB physical).
    return min(64 * 1024 * 1024, cap * 3 // 4)


def _const_spec(shape):
    """Constant-index block; single-buffered so big weight slabs don't double their VMEM cost."""
    index_map = lambda i, _n=len(shape): (0,) * _n
    buffered = getattr(pl, "Buffered", None)
    if buffered is not None:
        try:
            return pl.BlockSpec(shape, index_map, pipeline_mode=buffered(1))
        except TypeError:   # older JAX without pipeline_mode: fall back to default buffering
            pass
    return pl.BlockSpec(shape, index_map)


def _make_kernel(seq_len, bblk, has_skip):
    T = seq_len

    def kernel(*refs):
        if has_skip:
            (x_ref, nf_ref, nl_ref, w1_ref, b1_ref, w2_ref, b2_ref,
             wca1_ref, bca1_ref, wca2_ref, bca2_ref,
             wskip_ref, bskip_ref, o_ref) = refs
        else:
            (x_ref, nf_ref, nl_ref, w1_ref, b1_ref, w2_ref, b2_ref,
             wca1_ref, bca1_ref, wca2_ref, bca2_ref, o_ref) = refs

        x = x_ref[...]                    # (rows, Cp_in); rows = bblk * T (bblk whole sequences)
        rows = x.shape[0]
        nf = nf_ref[...]                  # (rows, 1) f32: 0.0 on the first row of each sequence
        nl = nl_ref[...]                  # (rows, 1) f32: 0.0 on the last row of each sequence

        def conv3(inp, w_ref, b_ref):
            # y[t] = x[t-1]@W0 + x[t]@W1 + x[t+1]@W2.
            # Run the three un-shifted partial products on the MXU, then shift the f32 partials
            # with XLU sublane rolls and zero them across sequence boundaries.
            p0 = jnp.dot(inp, w_ref[0], preferred_element_type=jnp.float32)
            p1 = jnp.dot(inp, w_ref[1], preferred_element_type=jnp.float32)
            p2 = jnp.dot(inp, w_ref[2], preferred_element_type=jnp.float32)
            y = (p1
                 + pltpu.roll(p0, shift=1, axis=0) * nf
                 + pltpu.roll(p2, shift=rows - 1, axis=0) * nl)
            return y + b_ref[...]

        h1 = jax.nn.silu(conv3(x, w1_ref, b1_ref))              # conv1 + bn1 (folded) + SiLU, f32
        out2 = conv3(h1.astype(w2_ref.dtype), w2_ref, b2_ref)   # conv2 + bn2 (folded), f32

        # Residual / skip path; trace-time branch: no matmul at all when in_ch == out_ch.
        if has_skip:
            identity = (jnp.dot(x, wskip_ref[...], preferred_element_type=jnp.float32)
                        + bskip_ref[...])
        else:
            identity = x.astype(jnp.float32)

        # Channel attention: per-sequence mean pool -> 1x1 -> ReLU -> 1x1 -> sigmoid -> scale.
        cp = out2.shape[1]
        if T % 8 == 0:
            out3 = out2.reshape(bblk, T, cp)                    # layout-preserving (T % 8 == 0)
            pooled = jnp.mean(out3, axis=1)                     # (bblk, cp)
        else:
            # Fallback (rare): per-sequence averaging as a small mask matmul.
            sb = lax.broadcasted_iota(jnp.int32, (bblk, rows), 0)
            sm = lax.broadcasted_iota(jnp.int32, (bblk, rows), 1)
            avg = jnp.where(sm // T == sb, jnp.float32(1.0 / T), jnp.float32(0.0))
            pooled = jnp.dot(avg, out2, preferred_element_type=jnp.float32)

        z = jnp.maximum(
            jnp.dot(pooled, wca1_ref[...], preferred_element_type=jnp.float32) + bca1_ref[...],
            0.0)
        ca = jax.nn.sigmoid(
            jnp.dot(z, wca2_ref[...], preferred_element_type=jnp.float32) + bca2_ref[...])

        if T % 8 == 0:
            attended = (out3 * ca[:, None, :]).reshape(rows, cp)
        else:
            em = lax.broadcasted_iota(jnp.int32, (rows, bblk), 0)
            eb = lax.broadcasted_iota(jnp.int32, (rows, bblk), 1)
            expand = jnp.where(em // T == eb, jnp.float32(1.0), jnp.float32(0.0))
            attended = out2 * jnp.dot(expand, ca, preferred_element_type=jnp.float32)

        o_ref[...] = jax.nn.silu(attended + identity).astype(o_ref.dtype)

    return kernel


def residual_block_cam(x_ncl, params, eps=1e-5, matmul_dtype=jnp.bfloat16,
                       target_rows=512, out_dtype=None):
    B, Cin, T = x_ncl.shape
    Cout = params["w1"].shape[0]
    Chid = params["wca1"].shape[0]
    assert params["w1"].shape[2] == 3, "only kernel=3 (padding=1) is implemented"
    has_skip = params["wskip"] is not None
    if not has_skip:
        assert Cin == Cout, "identity skip requires in_ch == out_ch"
    if out_dtype is None:
        out_dtype = matmul_dtype     # bf16 output halves HBM writeback in bf16 mode

    cin_p, cout_p, chid_p = (_round_up(c, 128) for c in (Cin, Cout, Chid))

    # Fold eval-mode BatchNorm into the preceding conv (plain JAX glue).
    def fold(w, b, gamma, beta, mean, var):
        scale = gamma / jnp.sqrt(var + eps)
        return w * scale[:, None, None], (b - mean) * scale + beta

    w1f, b1f = fold(params["w1"], params["b1"], params["g1"], params["be1"],
                    params["m1"], params["v1"])
    w2f, b2f = fold(params["w2"], params["b2"], params["g2"], params["be2"],
                    params["m2"], params["v2"])

    # (Cout, Cin, 3) -> (3, Cp_in, Cp_out): one zero-padded weight slab per conv tap.
    def stack_taps(w, ci_p, co_p):
        ws = jnp.stack([w[:, :, k].T for k in range(w.shape[2])], axis=0)    # (3, Ci, Co)
        return jnp.pad(ws, ((0, 0), (0, ci_p - ws.shape[1]), (0, co_p - ws.shape[2])))

    def pad_mat(a, r, c):
        return jnp.pad(a, ((0, r - a.shape[0]), (0, c - a.shape[1])))

    def pad_row(v, n):
        return jnp.pad(v.astype(jnp.float32), (0, n - v.shape[0]))[None, :]

    w1s = stack_taps(w1f, cin_p, cout_p).astype(matmul_dtype)
    w2s = stack_taps(w2f, cout_p, cout_p).astype(matmul_dtype)
    wca1 = pad_mat(params["wca1"][:, :, 0].T, cout_p, chid_p).astype(jnp.float32)  # tiny, keep f32
    wca2 = pad_mat(params["wca2"][:, :, 0].T, chid_p, cout_p).astype(jnp.float32)

    # Flatten to rows = batch*time, lanes = channels; pad channels to a multiple of 128.
    x_rows = jnp.transpose(x_ncl, (0, 2, 1)).reshape(B * T, Cin)
    x_rows = jnp.pad(x_rows, ((0, 0), (0, cin_p - Cin))).astype(matmul_dtype)

    bblk = _choose_bblk(B, T, target_rows)
    rows = bblk * T
    grid = (B // bblk,)

    # Hoisted per-row sequence-boundary masks (identical for every block: bblk whole sequences).
    t_idx = jnp.arange(rows) % T
    not_first = (t_idx != 0).astype(jnp.float32)[:, None]
    not_last = (t_idx != T - 1).astype(jnp.float32)[:, None]

    operands = [x_rows, not_first, not_last,
                w1s, pad_row(b1f, cout_p),
                w2s, pad_row(b2f, cout_p),
                wca1, pad_row(params["bca1"], chid_p),
                wca2, pad_row(params["bca2"], cout_p)]
    in_specs = [pl.BlockSpec((rows, cin_p), lambda i: (i, 0)),
                _const_spec((rows, 1)), _const_spec((rows, 1)),
                _const_spec((3, cin_p, cout_p)), _const_spec((1, cout_p)),
                _const_spec((3, cout_p, cout_p)), _const_spec((1, cout_p)),
                _const_spec((cout_p, chid_p)), _const_spec((1, chid_p)),
                _const_spec((chid_p, cout_p)), _const_spec((1, cout_p))]
    if has_skip:
        operands += [pad_mat(params["wskip"][:, :, 0].T, cin_p, cout_p).astype(matmul_dtype),
                     pad_row(params["bskip"], cout_p)]
        in_specs += [_const_spec((cin_p, cout_p)), _const_spec((1, cout_p))]

    out_rows = pl.pallas_call(
        _make_kernel(T, bblk, has_skip),
        out_shape=jax.ShapeDtypeStruct((B * T, cout_p), out_dtype),
        grid=grid,
        in_specs=in_specs,
        out_specs=pl.BlockSpec((rows, cout_p), lambda i: (i, 0)),
        compiler_params=pltpu.CompilerParams(
            dimension_semantics=("parallel",),
            vmem_limit_bytes=_vmem_limit_bytes()),
    )(*operands)

    # Drop channel padding and restore the PyTorch NCL layout.
    return jnp.transpose(out_rows[:, :Cout].reshape(B, T, Cout), (0, 2, 1))


def reference(x, params, eps=1e-5):
    """Pure-JAX reference matching the PyTorch forward (eval-mode BN)."""
    def conv1d(x, w, b, pad):
        y = lax.conv_general_dilated(x, w, (1,), [(pad, pad)],
                                     dimension_numbers=("NCH", "OIH", "NCH"))
        return y + b[None, :, None]

    def bn(x, g, be, m, v):
        return ((x - m[None, :, None]) / jnp.sqrt(v[None, :, None] + eps)
                * g[None, :, None] + be[None, :, None])

    if params["wskip"] is not None:
        identity = conv1d(x, params["wskip"], params["bskip"], 0)
    else:
        identity = x
    out = jax.nn.silu(bn(conv1d(x, params["w1"], params["b1"], 1),
                         params["g1"], params["be1"], params["m1"], params["v1"]))
    out = bn(conv1d(out, params["w2"], params["b2"], 1),
             params["g2"], params["be2"], params["m2"], params["v2"])
    pooled = jnp.mean(out, axis=2, keepdims=True)
    z = jax.nn.relu(conv1d(pooled, params["wca1"], params["bca1"], 0))
    ca = jax.nn.sigmoid(conv1d(z, params["wca2"], params["bca2"], 0))
    return jax.nn.silu(out * ca + identity)


def make_params(key, in_ch, out_ch, kernel=3):
    hid = out_ch // 8
    ks = jax.random.split(key, 16)
    p = {
        "w1": 0.2 * jax.random.normal(ks[0], (out_ch, in_ch, kernel), jnp.float32),
        "b1": 0.1 * jax.random.normal(ks[1], (out_ch,), jnp.float32),
        "g1": 1.0 + 0.1 * jax.random.normal(ks[2], (out_ch,), jnp.float32),
        "be1": 0.1 * jax.random.normal(ks[3], (out_ch,), jnp.float32),
        "m1": 0.1 * jax.random.normal(ks[4], (out_ch,), jnp.float32),
        "v1": jax.random.uniform(ks[5], (out_ch,), jnp.float32, 0.5, 1.5),
        "w2": 0.2 * jax.random.normal(ks[6], (out_ch, out_ch, kernel), jnp.float32),
        "b2": 0.1 * jax.random.normal(ks[7], (out_ch,), jnp.float32),
        "g2": 1.0 + 0.1 * jax.random.normal(ks[8], (out_ch,), jnp.float32),
        "be2": 0.1 * jax.random.normal(ks[9], (out_ch,), jnp.float32),
        "m2": 0.1 * jax.random.normal(ks[10], (out_ch,), jnp.float32),
        "v2": jax.random.uniform(ks[11], (out_ch,), jnp.float32, 0.5, 1.5),
        "wca1": 0.3 * jax.random.normal(ks[12], (hid, out_ch, 1), jnp.float32),
        "bca1": 0.1 * jax.random.normal(ks[13], (hid,), jnp.float32),
        "wca2": 0.3 * jax.random.normal(ks[14], (out_ch, hid, 1), jnp.float32),
        "bca2": 0.1 * jax.random.normal(ks[15], (out_ch,), jnp.float32),
    }
    if in_ch != out_ch:
        k2 = jax.random.split(ks[0], 2)
        p["wskip"] = 0.3 * jax.random.normal(k2[0], (out_ch, in_ch, 1), jnp.float32)
        p["bskip"] = 0.1 * jax.random.normal(k2[1], (out_ch,), jnp.float32)
    else:
        p["wskip"] = None
        p["bskip"] = None
    return p


if __name__ == "__main__":
    key = jax.random.PRNGKey(0)
    kx, kp, kx2, kp2 = jax.random.split(key, 4)

    # Config A: in_ch != out_ch -> 1x1-conv skip path is exercised.
    B, in_ch, out_ch, T = 2, 16, 32, 16
    x = jax.random.normal(kx, (B, in_ch, T), jnp.float32)        # PyTorch NCL layout
    params = make_params(kp, in_ch, out_ch)
    ref = reference(x, params)

    out_f32 = jax.block_until_ready(residual_block_cam(x, params, matmul_dtype=jnp.float32))
    assert out_f32.shape == (B, out_ch, T), out_f32.shape
    assert jnp.allclose(out_f32, ref, atol=2e-3, rtol=2e-3), \
        float(jnp.max(jnp.abs(out_f32 - ref)))

    out_bf16 = jax.block_until_ready(residual_block_cam(x, params))   # bf16 matmuls + bf16 output
    assert jnp.allclose(out_bf16.astype(jnp.float32), ref, atol=1e-1, rtol=1e-1), \
        float(jnp.max(jnp.abs(out_bf16.astype(jnp.float32) - ref)))

    # Config B: in_ch == out_ch -> identity residual (no skip matmul generated in the kernel).
    x2 = jax.random.normal(kx2, (B, out_ch, T), jnp.float32)
    params2 = make_params(kp2, out_ch, out_ch)
    ref2 = reference(x2, params2)
    out2_f32 = jax.block_until_ready(residual_block_cam(x2, params2, matmul_dtype=jnp.float32))
    assert jnp.allclose(out2_f32, ref2, atol=2e-3, rtol=2e-3), \
        float(jnp.max(jnp.abs(out2_f32 - ref2)))

    print("KERNEL_OK")
</pallas_src>

<mosaic_0001>
module attributes {stable_mosaic.version = 11 : i64} {
  func.func @kernel(%arg0: i32, %arg1: memref<16x128xf32, #tpu.memory_space<vmem>>, %arg2: memref<16x1xf32, #tpu.memory_space<vmem>>, %arg3: memref<16x1xf32, #tpu.memory_space<vmem>>, %arg4: memref<3x128x128xf32, #tpu.memory_space<vmem>>, %arg5: memref<1x128xf32, #tpu.memory_space<vmem>>, %arg6: memref<3x128x128xf32, #tpu.memory_space<vmem>>, %arg7: memref<1x128xf32, #tpu.memory_space<vmem>>, %arg8: memref<128x128xf32, #tpu.memory_space<vmem>>, %arg9: memref<1x128xf32, #tpu.memory_space<vmem>>, %arg10: memref<128x128xf32, #tpu.memory_space<vmem>>, %arg11: memref<1x128xf32, #tpu.memory_space<vmem>>, %arg12: memref<128x128xf32, #tpu.memory_space<vmem>>, %arg13: memref<1x128xf32, #tpu.memory_space<vmem>>, %arg14: memref<16x128xf32, #tpu.memory_space<vmem>>) attributes {dimension_semantics = [#tpu.dimension_semantics<parallel>], iteration_bounds = array<i64: 2>, scalar_prefetch = 0 : i64, scratch_operands = 0 : i64, tpu.core_type = #tpu.core_type<tc>, window_params = [{transform_indices = @transform_0, window_bounds = array<i64: 16, 128>}, {pipeline_mode = #tpu.pipeline_mode<synchronous>, transform_indices = @transform_1, window_bounds = array<i64: 16, 1>}, {pipeline_mode = #tpu.pipeline_mode<synchronous>, transform_indices = @transform_2, window_bounds = array<i64: 16, 1>}, {pipeline_mode = #tpu.pipeline_mode<synchronous>, transform_indices = @transform_3, window_bounds = array<i64: 3, 128, 128>}, {pipeline_mode = #tpu.pipeline_mode<synchronous>, transform_indices = @transform_4, window_bounds = array<i64: 1, 128>}, {pipeline_mode = #tpu.pipeline_mode<synchronous>, transform_indices = @transform_5, window_bounds = array<i64: 3, 128, 128>}, {pipeline_mode = #tpu.pipeline_mode<synchronous>, transform_indices = @transform_6, window_bounds = array<i64: 1, 128>}, {pipeline_mode = #tpu.pipeline_mode<synchronous>, transform_indices = @transform_7, window_bounds = array<i64: 128, 128>}, {pipeline_mode = #tpu.pipeline_mode<synchronous>, transform_indices = @transform_8, window_bounds = array<i64: 1, 128>}, {pipeline_mode = #tpu.pipeline_mode<synchronous>, transform_indices = @transform_9, window_bounds = array<i64: 128, 128>}, {pipeline_mode = #tpu.pipeline_mode<synchronous>, transform_indices = @transform_10, window_bounds = array<i64: 1, 128>}, {pipeline_mode = #tpu.pipeline_mode<synchronous>, transform_indices = @transform_11, window_bounds = array<i64: 128, 128>}, {pipeline_mode = #tpu.pipeline_mode<synchronous>, transform_indices = @transform_12, window_bounds = array<i64: 1, 128>}, {transform_indices = @transform_13, window_bounds = array<i64: 16, 128>}]} {
    %c0 = arith.constant 0 : index
    %c0_0 = arith.constant 0 : index
    %0 = vector.load %arg1[%c0, %c0_0] : memref<16x128xf32, #tpu.memory_space<vmem>>, vector<16x128xf32>
    %c0_1 = arith.constant 0 : index
    %c0_2 = arith.constant 0 : index
    %1 = vector.load %arg2[%c0_1, %c0_2] : memref<16x1xf32, #tpu.memory_space<vmem>>, vector<16x1xf32>
    %c0_3 = arith.constant 0 : index
    %c0_4 = arith.constant 0 : index
    %2 = vector.load %arg3[%c0_3, %c0_4] : memref<16x1xf32, #tpu.memory_space<vmem>>, vector<16x1xf32>
    %c0_5 = arith.constant 0 : index
    %c0_6 = arith.constant 0 : index
    %c0_7 = arith.constant 0 : index
    %3 = vector.load %arg4[%c0_5, %c0_6, %c0_7] : memref<3x128x128xf32, #tpu.memory_space<vmem>>, vector<1x128x128xf32>
    %4 = vector.shape_cast %3 : vector<1x128x128xf32> to vector<128x128xf32>
    %cst = arith.constant dense<0.000000e+00> : vector<16x128xf32>
    %5 = tpu.matmul %0, %4, %cst {dimension_numbers = #tpu.dot_dimension_numbers<[1], [0], [0], [1], [0, 0, 1, 1], [], []>} : vector<16x128xf32>, vector<128x128xf32>, vector<16x128xf32> -> vector<16x128xf32>
    %c1 = arith.constant 1 : index
    %c0_8 = arith.constant 0 : index
    %c0_9 = arith.constant 0 : index
    %6 = vector.load %arg4[%c1, %c0_8, %c0_9] : memref<3x128x128xf32, #tpu.memory_space<vmem>>, vector<1x128x128xf32>
    %7 = vector.shape_cast %6 : vector<1x128x128xf32> to vector<128x128xf32>
    %cst_10 = arith.constant dense<0.000000e+00> : vector<16x128xf32>
    %8 = tpu.matmul %0, %7, %cst_10 {dimension_numbers = #tpu.dot_dimension_numbers<[1], [0], [0], [1], [0, 0, 1, 1], [], []>} : vector<16x128xf32>, vector<128x128xf32>, vector<16x128xf32> -> vector<16x128xf32>
    %c2 = arith.constant 2 : index
    %c0_11 = arith.constant 0 : index
    %c0_12 = arith.constant 0 : index
    %9 = vector.load %arg4[%c2, %c0_11, %c0_12] : memref<3x128x128xf32, #tpu.memory_space<vmem>>, vector<1x128x128xf32>
    %10 = vector.shape_cast %9 : vector<1x128x128xf32> to vector<128x128xf32>
    %cst_13 = arith.constant dense<0.000000e+00> : vector<16x128xf32>
    %11 = tpu.matmul %0, %10, %cst_13 {dimension_numbers = #tpu.dot_dimension_numbers<[1], [0], [0], [1], [0, 0, 1, 1], [], []>} : vector<16x128xf32>, vector<128x128xf32>, vector<16x128xf32> -> vector<16x128xf32>
    %c1_i32 = arith.constant 1 : i32
    %12 = tpu.dynamic_rotate %5 by %c1_i32 dim 0 : vector<16x128xf32>, i32 -> vector<16x128xf32>
    %13 = vector.broadcast %1 : vector<16x1xf32> to vector<16x128xf32>
    %14 = arith.mulf %12, %13 : vector<16x128xf32>
    %15 = arith.addf %8, %14 : vector<16x128xf32>
    %c15_i32 = arith.constant 15 : i32
    %16 = tpu.dynamic_rotate %11 by %c15_i32 dim 0 : vector<16x128xf32>, i32 -> vector<16x128xf32>
    %17 = vector.broadcast %2 : vector<16x1xf32> to vector<16x128xf32>
    %18 = arith.mulf %16, %17 : vector<16x128xf32>
    %19 = arith.addf %15, %18 : vector<16x128xf32>
    %c0_14 = arith.constant 0 : index
    %c0_15 = arith.constant 0 : index
    %20 = vector.load %arg5[%c0_14, %c0_15] : memref<1x128xf32, #tpu.memory_space<vmem>>, vector<1x128xf32>
    %21 = vector.broadcast %20 : vector<1x128xf32> to vector<16x128xf32>
    %22 = arith.addf %19, %21 : vector<16x128xf32>
    %23 = arith.negf %22 : vector<16x128xf32>
    %24 = math.exp %23 : vector<16x128xf32>
    %cst_16 = arith.constant 1.000000e+00 : f32
    %25 = vector.broadcast %cst_16 : f32 to vector<16x128xf32>
    %26 = arith.addf %25, %24 : vector<16x128xf32>
    %27 = arith.divf %25, %26 : vector<16x128xf32>
    %28 = arith.mulf %22, %27 : vector<16x128xf32>
    %c0_17 = arith.constant 0 : index
    %c0_18 = arith.constant 0 : index
    %c0_19 = arith.constant 0 : index
    %29 = vector.load %arg6[%c0_17, %c0_18, %c0_19] : memref<3x128x128xf32, #tpu.memory_space<vmem>>, vector<1x128x128xf32>
    %30 = vector.shape_cast %29 : vector<1x128x128xf32> to vector<128x128xf32>
    %cst_20 = arith.constant dense<0.000000e+00> : vector<16x128xf32>
    %31 = tpu.matmul %28, %30, %cst_20 {dimension_numbers = #tpu.dot_dimension_numbers<[1], [0], [0], [1], [0, 0, 1, 1], [], []>} : vector<16x128xf32>, vector<128x128xf32>, vector<16x128xf32> -> vector<16x128xf32>
    %c1_21 = arith.constant 1 : index
    %c0_22 = arith.constant 0 : index
    %c0_23 = arith.constant 0 : index
    %32 = vector.load %arg6[%c1_21, %c0_22, %c0_23] : memref<3x128x128xf32, #tpu.memory_space<vmem>>, vector<1x128x128xf32>
    %33 = vector.shape_cast %32 : vector<1x128x128xf32> to vector<128x128xf32>
    %cst_24 = arith.constant dense<0.000000e+00> : vector<16x128xf32>
    %34 = tpu.matmul %28, %33, %cst_24 {dimension_numbers = #tpu.dot_dimension_numbers<[1], [0], [0], [1], [0, 0, 1, 1], [], []>} : vector<16x128xf32>, vector<128x128xf32>, vector<16x128xf32> -> vector<16x128xf32>
    %c2_25 = arith.constant 2 : index
    %c0_26 = arith.constant 0 : index
    %c0_27 = arith.constant 0 : index
    %35 = vector.load %arg6[%c2_25, %c0_26, %c0_27] : memref<3x128x128xf32, #tpu.memory_space<vmem>>, vector<1x128x128xf32>
    %36 = vector.shape_cast %35 : vector<1x128x128xf32> to vector<128x128xf32>
    %cst_28 = arith.constant dense<0.000000e+00> : vector<16x128xf32>
    %37 = tpu.matmul %28, %36, %cst_28 {dimension_numbers = #tpu.dot_dimension_numbers<[1], [0], [0], [1], [0, 0, 1, 1], [], []>} : vector<16x128xf32>, vector<128x128xf32>, vector<16x128xf32> -> vector<16x128xf32>
    %c1_i32_29 = arith.constant 1 : i32
    %38 = tpu.dynamic_rotate %31 by %c1_i32_29 dim 0 : vector<16x128xf32>, i32 -> vector<16x128xf32>
    %39 = vector.broadcast %1 : vector<16x1xf32> to vector<16x128xf32>
    %40 = arith.mulf %38, %39 : vector<16x128xf32>
    %41 = arith.addf %34, %40 : vector<16x128xf32>
    %c15_i32_30 = arith.constant 15 : i32
    %42 = tpu.dynamic_rotate %37 by %c15_i32_30 dim 0 : vector<16x128xf32>, i32 -> vector<16x128xf32>
    %43 = vector.broadcast %2 : vector<16x1xf32> to vector<16x128xf32>
    %44 = arith.mulf %42, %43 : vector<16x128xf32>
    %45 = arith.addf %41, %44 : vector<16x128xf32>
    %c0_31 = arith.constant 0 : index
    %c0_32 = arith.constant 0 : index
    %46 = vector.load %arg7[%c0_31, %c0_32] : memref<1x128xf32, #tpu.memory_space<vmem>>, vector<1x128xf32>
    %47 = vector.broadcast %46 : vector<1x128xf32> to vector<16x128xf32>
    %48 = arith.addf %45, %47 : vector<16x128xf32>
    %c0_33 = arith.constant 0 : index
    %c0_34 = arith.constant 0 : index
    %49 = vector.load %arg12[%c0_33, %c0_34] : memref<128x128xf32, #tpu.memory_space<vmem>>, vector<128x128xf32>
    %cst_35 = arith.constant dense<0.000000e+00> : vector<16x128xf32>
    %50 = tpu.matmul %0, %49, %cst_35 {dimension_numbers = #tpu.dot_dimension_numbers<[1], [0], [0], [1], [0, 0, 1, 1], [], []>} : vector<16x128xf32>, vector<128x128xf32>, vector<16x128xf32> -> vector<16x128xf32>
    %c0_36 = arith.constant 0 : index
    %c0_37 = arith.constant 0 : index
    %51 = vector.load %arg13[%c0_36, %c0_37] : memref<1x128xf32, #tpu.memory_space<vmem>>, vector<1x128xf32>
    %52 = vector.broadcast %51 : vector<1x128xf32> to vector<16x128xf32>
    %53 = arith.addf %50, %52 : vector<16x128xf32>
    %54 = vector.shape_cast %48 : vector<16x128xf32> to vector<1x16x128xf32>
    %cst_38 = arith.constant dense<0.000000e+00> : vector<1x128xf32>
    %55 = vector.multi_reduction <add>, %54, %cst_38 [1] : vector<1x16x128xf32> to vector<1x128xf32>
    %cst_39 = arith.constant 1.600000e+01 : f32
    %56 = vector.broadcast %cst_39 : f32 to vector<1x128xf32>
    %57 = arith.divf %55, %56 : vector<1x128xf32>
    %c0_40 = arith.constant 0 : index
    %c0_41 = arith.constant 0 : index
    %58 = vector.load %arg8[%c0_40, %c0_41] : memref<128x128xf32, #tpu.memory_space<vmem>>, vector<128x128xf32>
    %cst_42 = arith.constant dense<0.000000e+00> : vector<1x128xf32>
    %59 = tpu.matmul %57, %58, %cst_42 {dimension_numbers = #tpu.dot_dimension_numbers<[1], [0], [0], [1], [0, 0, 1, 1], [], []>} : vector<1x128xf32>, vector<128x128xf32>, vector<1x128xf32> -> vector<1x128xf32>
    %c0_43 = arith.constant 0 : index
    %c0_44 = arith.constant 0 : index
    %60 = vector.load %arg9[%c0_43, %c0_44] : memref<1x128xf32, #tpu.memory_space<vmem>>, vector<1x128xf32>
    %61 = arith.addf %59, %60 : vector<1x128xf32>
    %cst_45 = arith.constant 0.000000e+00 : f32
    %62 = vector.broadcast %cst_45 : f32 to vector<1x128xf32>
    %63 = arith.maximumf %61, %62 : vector<1x128xf32>
    %c0_46 = arith.constant 0 : index
    %c0_47 = arith.constant 0 : index
    %64 = vector.load %arg10[%c0_46, %c0_47] : memref<128x128xf32, #tpu.memory_space<vmem>>, vector<128x128xf32>
    %cst_48 = arith.constant dense<0.000000e+00> : vector<1x128xf32>
    %65 = tpu.matmul %63, %64, %cst_48 {dimension_numbers = #tpu.dot_dimension_numbers<[1], [0], [0], [1], [0, 0, 1, 1], [], []>} : vector<1x128xf32>, vector<128x128xf32>, vector<1x128xf32> -> vector<1x128xf32>
    %c0_49 = arith.constant 0 : index
    %c0_50 = arith.constant 0 : index
    %66 = vector.load %arg11[%c0_49, %c0_50] : memref<1x128xf32, #tpu.memory_space<vmem>>, vector<1x128xf32>
    %67 = arith.addf %65, %66 : vector<1x128xf32>
    %68 = arith.negf %67 : vector<1x128xf32>
    %69 = math.exp %68 : vector<1x128xf32>
    %cst_51 = arith.constant 1.000000e+00 : f32
    %70 = vector.broadcast %cst_51 : f32 to vector<1x128xf32>
    %71 = arith.addf %70, %69 : vector<1x128xf32>
    %72 = arith.divf %70, %71 : vector<1x128xf32>
    %73 = vector.shape_cast %72 : vector<1x128xf32> to vector<1x1x128xf32>
    %74 = vector.broadcast %73 : vector<1x1x128xf32> to vector<1x16x128xf32>
    %75 = arith.mulf %54, %74 : vector<1x16x128xf32>
    %76 = vector.shape_cast %75 : vector<1x16x128xf32> to vector<16x128xf32>
    %77 = arith.addf %76, %53 : vector<16x128xf32>
    %78 = arith.negf %77 : vector<16x128xf32>
    %79 = math.exp %78 : vector<16x128xf32>
    %cst_52 = arith.constant 1.000000e+00 : f32
    %80 = vector.broadcast %cst_52 : f32 to vector<16x128xf32>
    %81 = arith.addf %80, %79 : vector<16x128xf32>
    %82 = arith.divf %80, %81 : vector<16x128xf32>
    %83 = arith.mulf %77, %82 : vector<16x128xf32>
    %c0_53 = arith.constant 0 : index
    %c0_54 = arith.constant 0 : index
    %84 = vector.load %arg14[%c0_53, %c0_54] : memref<16x128xf32, #tpu.memory_space<vmem>>, vector<16x128xf32>
    tpu.vector_store %arg14[%c0_53, %c0_54], %83 {strides = array<i32>} : memref<16x128xf32, #tpu.memory_space<vmem>>, vector<16x128xf32>,
    return
  }
  func.func @transform_0(%arg0: i32) -> (i32, i32) {
    %c0_i32 = arith.constant 0 : i32
    %c0_i32_0 = arith.constant 0 : i32
    return %arg0, %c0_i32 : i32, i32
  }
  func.func @transform_1(%arg0: i32) -> (i32, i32) {
    %c0_i32 = arith.constant 0 : i32
    %c0_i32_0 = arith.constant 0 : i32
    %c0_i32_1 = arith.constant 0 : i32
    return %c0_i32, %c0_i32_0 : i32, i32
  }
  func.func @transform_2(%arg0: i32) -> (i32, i32) {
    %c0_i32 = arith.constant 0 : i32
    %c0_i32_0 = arith.constant 0 : i32
    %c0_i32_1 = arith.constant 0 : i32
    return %c0_i32, %c0_i32_0 : i32, i32
  }
  func.func @transform_3(%arg0: i32) -> (i32, i32, i32) {
    %c0_i32 = arith.constant 0 : i32
    %c0_i32_0 = arith.constant 0 : i32
    %c0_i32_1 = arith.constant 0 : i32
    %c0_i32_2 = arith.constant 0 : i32
    return %c0_i32, %c0_i32_0, %c0_i32_1 : i32, i32, i32
  }
  func.func @transform_4(%arg0: i32) -> (i32, i32) {
    %c0_i32 = arith.constant 0 : i32
    %c0_i32_0 = arith.constant 0 : i32
    %c0_i32_1 = arith.constant 0 : i32
    return %c0_i32, %c0_i32_0 : i32, i32
  }
  func.func @transform_5(%arg0: i32) -> (i32, i32, i32) {
    %c0_i32 = arith.constant 0 : i32
    %c0_i32_0 = arith.constant 0 : i32
    %c0_i32_1 = arith.constant 0 : i32
    %c0_i32_2 = arith.constant 0 : i32
    return %c0_i32, %c0_i32_0, %c0_i32_1 : i32, i32, i32
  }
  func.func @transform_6(%arg0: i32) -> (i32, i32) {
    %c0_i32 = arith.constant 0 : i32
    %c0_i32_0 = arith.constant 0 : i32
    %c0_i32_1 = arith.constant 0 : i32
    return %c0_i32, %c0_i32_0 : i32, i32
  }
  func.func @transform_7(%arg0: i32) -> (i32, i32) {
    %c0_i32 = arith.constant 0 : i32
    %c0_i32_0 = arith.constant 0 : i32
    %c0_i32_1 = arith.constant 0 : i32
    return %c0_i32, %c0_i32_0 : i32, i32
  }
  func.func @transform_8(%arg0: i32) -> (i32, i32) {
    %c0_i32 = arith.constant 0 : i32
    %c0_i32_0 = arith.constant 0 : i32
    %c0_i32_1 = arith.constant 0 : i32
    return %c0_i32, %c0_i32_0 : i32, i32
  }
  func.func @transform_9(%arg0: i32) -> (i32, i32) {
    %c0_i32 = arith.constant 0 : i32
    %c0_i32_0 = arith.constant 0 : i32
    %c0_i32_1 = arith.constant 0 : i32
    return %c0_i32, %c0_i32_0 : i32, i32
  }
  func.func @transform_10(%arg0: i32) -> (i32, i32) {
    %c0_i32 = arith.constant 0 : i32
    %c0_i32_0 = arith.constant 0 : i32
    %c0_i32_1 = arith.constant 0 : i32
    return %c0_i32, %c0_i32_0 : i32, i32
  }
  func.func @transform_11(%arg0: i32) -> (i32, i32) {
    %c0_i32 = arith.constant 0 : i32
    %c0_i32_0 = arith.constant 0 : i32
    %c0_i32_1 = arith.constant 0 : i32
    return %c0_i32, %c0_i32_0 : i32, i32
  }
  func.func @transform_12(%arg0: i32) -> (i32, i32) {
    %c0_i32 = arith.constant 0 : i32
    %c0_i32_0 = arith.constant 0 : i32
    %c0_i32_1 = arith.constant 0 : i32
    return %c0_i32, %c0_i32_0 : i32, i32
  }
  func.func @transform_13(%arg0: i32) -> (i32, i32) {
    %c0_i32 = arith.constant 0 : i32
    %c0_i32_0 = arith.constant 0 : i32
    return %arg0, %c0_i32 : i32, i32
  }
}

</mosaic_0001>

<llo_original>
// kernel: tpu_custom_call.1
$region0: #{tpu_custom_call.1}
  #allocation0 [shape = 'u32[]', space=smem, size = 0x4, offset = 0x4, fixed_abs, tag = 'smem constant byte address 0x4 - core index']
  #allocation1 [shape = 'u32[144,128]{1,0:T(1,128)}', space=vmem, size = 0x12000, scoped, tag = 'internal scratch']
  %s0 = inlined_call_operand.hbm [shape: f32[32,128], index: 0, kind: input, shape index: {}]
  %s1 = inlined_call_operand.hbm [shape: f32[16,1], index: 1, kind: input, shape index: {}]
  %s2 = inlined_call_operand.hbm [shape: f32[16,1], index: 2, kind: input, shape index: {}]
  %s3 = inlined_call_operand.hbm [shape: f32[3,128,128], index: 3, kind: input, shape index: {}]
  %s4 = inlined_call_operand.hbm [shape: f32[1,128], index: 4, kind: input, shape index: {}]
  %s5 = inlined_call_operand.hbm [shape: f32[3,128,128], index: 5, kind: input, shape index: {}]
  %s6 = inlined_call_operand.hbm [shape: f32[1,128], index: 6, kind: input, shape index: {}]
  %s7 = inlined_call_operand.hbm [shape: f32[128,128], index: 7, kind: input, shape index: {}]
  %s8 = inlined_call_operand.hbm [shape: f32[1,128], index: 8, kind: input, shape index: {}]
  %s9 = inlined_call_operand.hbm [shape: f32[128,128], index: 9, kind: input, shape index: {}]
  %s10 = inlined_call_operand.hbm [shape: f32[1,128], index: 10, kind: input, shape index: {}]
  %s11 = inlined_call_operand.hbm [shape: f32[128,128], index: 11, kind: input, shape index: {}]
  %s12 = inlined_call_operand.hbm [shape: f32[1,128], index: 12, kind: input, shape index: {}]
  %s13 = inlined_call_operand.hbm [shape: f32[32,128], index: 13, kind: output, shape index: {}]
  %s14 = sld [smem:[#allocation0]]
  $region137: #{tpu_custom_call.1} parent=0
    _
  %s16 = ssub.s32 1, %s14
  %s17 = scalar_select 0, %s16, %s14
  $region1: #{tpu_custom_call.1} parent=0
    #allocation2 [shape = 'u8[16384]{0}', space=vmem, size = 0x4000, scoped, tag = 'input window, operand 0']
    #allocation3 [shape = 's32[2]{0}', space=sflag, size = 0x8, scoped, tag = 'scoped memory for tpu_custom_call.1']
    #allocation4 [shape = 's32[2]{0}', space=sflag, size = 0x8, scoped, tag = 'scoped memory for tpu_custom_call.1']
    #allocation5 [shape = 'u8[8192]{0}', space=vmem, size = 0x2000, scoped, tag = 'input window, operand 1, single buffered']
    #allocation6 [shape = 's32[1]{0}', space=sflag, size = 0x4, scoped, tag = 'scoped memory for tpu_custom_call.1']
    #allocation7 [shape = 'u8[8192]{0}', space=vmem, size = 0x2000, scoped, tag = 'input window, operand 2, single buffered']
    #allocation8 [shape = 'u8[196608]{0}', space=vmem, size = 0x30000, scoped, tag = 'input window, operand 3, single buffered']
    #allocation9 [shape = 's32[1]{0}', space=sflag, size = 0x4, scoped, tag = 'scoped memory for tpu_custom_call.1']
    #allocation10 [shape = 'u8[512]{0}', space=vmem, size = 0x400, scoped, tag = 'input window, operand 4, single buffered']
    #allocation11 [shape = 'u8[196608]{0}', space=vmem, size = 0x30000, scoped, tag = 'input window, operand 5, single buffered']
    #allocation12 [shape = 's32[1]{0}', space=sflag, size = 0x4, scoped, tag = 'scoped memory for tpu_custom_call.1']
    #allocation13 [shape = 'u8[512]{0}', space=vmem, size = 0x400, scoped, tag = 'input window, operand 6, single buffered']
    #allocation14 [shape = 'u8[65536]{0}', space=vmem, size = 0x10000, scoped, tag = 'input window, operand 7, single buffered']
    #allocation15 [shape = 's32[1]{0}', space=sflag, size = 0x4, scoped, tag = 'scoped memory for tpu_custom_call.1']
    #allocation16 [shape = 'u8[512]{0}', space=vmem, size = 0x400, scoped, tag = 'input window, operand 8, single buffered']
    #allocation17 [shape = 'u8[65536]{0}', space=vmem, size = 0x10000, scoped, tag = 'input window, operand 9, single buffered']
    #allocation18 [shape = 's32[1]{0}', space=sflag, size = 0x4, scoped, tag = 'scoped memory for tpu_custom_call.1']
    #allocation19 [shape = 'u8[512]{0}', space=vmem, size = 0x400, scoped, tag = 'input window, operand 10, single buffered']
    #allocation20 [shape = 'u8[65536]{0}', space=vmem, size = 0x10000, scoped, tag = 'input window, operand 11, single buffered']
    #allocation21 [shape = 's32[1]{0}', space=sflag, size = 0x4, scoped, tag = 'scoped memory for tpu_custom_call.1']
    #allocation22 [shape = 'u8[512]{0}', space=vmem, size = 0x400, scoped, tag = 'input window, operand 12, single buffered']
    #allocation23 [shape = 'u8[16384]{0}', space=vmem, size = 0x4000, scoped, tag = 'output window, operand 0']
    %18 = vsyncpa [#allocation3], 0
    %s19 = scalar_lea.sflag [#allocation3], 1
    %20 = vsyncpa %s19, 0
    %21 = vsyncpa [#allocation6], 0
    %22 = vsyncpa [#allocation9], 0
    %23 = vsyncpa [#allocation12], 0
    %24 = vsyncpa [#allocation15], 0
    %25 = vsyncpa [#allocation18], 0
    %26 = vsyncpa [#allocation21], 0
    %27 = vsyncpa [#allocation4], 0
    %s28 = scalar_lea.sflag [#allocation4], 1
    %29 = vsyncpa %s28, 0
    loop: start=0, step=1, limit=4
    $region2: #{tpu_custom_call.1} parent=1 // loop_pre_header
      _
    $region3: #{tpu_custom_call.1} parent=1 // loop_header
      %s31 = sphi 0, %s35
      %p32 = scmp.ge.s32.totalorder %s31, 4
      %s41 = sphi 0, %s43
      %s44 = sphi 0, %s41
      %s45 = sphi 0, %s44
      %s61 = sphi 0, %s45
      %s65 = sphi 0, %s65
      %s67 = sphi 0, %s65
      %s68 = sphi 0, %s67
      %s82 = sphi 0, %s68
      %s86 = sphi 0, %s86
      %s88 = sphi 0, %s86
      %s89 = sphi 0, %s88
      %s103 = sphi 0, %s89
      %s107 = sphi 0, %s107
      %s109 = sphi 0, %s107
      %s110 = sphi 0, %s109
      %s124 = sphi 0, %s110
      %s128 = sphi 0, %s128
      %s130 = sphi 0, %s128
      %s131 = sphi 0, %s130
      %s145 = sphi 0, %s131
      %s149 = sphi 0, %s149
      %s151 = sphi 0, %s149
      %s152 = sphi 0, %s151
      %s166 = sphi 0, %s152
      %s170 = sphi 0, %s170
      %s172 = sphi 0, %s170
      %s173 = sphi 0, %s172
      %s187 = sphi 0, %s173
      %s191 = sphi 0, %s191
      %s193 = sphi 0, %s191
      %s194 = sphi 0, %s193
      %s208 = sphi 0, %s194
      %s212 = sphi 0, %s212
      %s214 = sphi 0, %s212
      %s215 = sphi 0, %s214
      %s229 = sphi 0, %s215
      %s233 = sphi 0, %s233
      %s235 = sphi 0, %s233
      %s236 = sphi 0, %s235
      %s250 = sphi 0, %s236
      %s254 = sphi 0, %s254
      %s256 = sphi 0, %s254
      %s257 = sphi 0, %s256
      %s271 = sphi 0, %s257
      %s275 = sphi 0, %s275
      %s277 = sphi 0, %s275
      %s278 = sphi 0, %s277
      %s292 = sphi 0, %s278
      %s296 = sphi 0, %s296
      %s298 = sphi 0, %s296
      %s299 = sphi 0, %s298
      %s313 = sphi 0, %s299
      %s319 = sphi 0, %s321
      %s322 = sphi 0, %s319
      %s323 = sphi 0, %s322
      %s339 = sphi 0, %s323
    $region4: #{tpu_custom_call.1} parent=1 // loop_header_branch
      %34 = sbr.rel (%p32) target = $region8
    $region5: #{tpu_custom_call.1} parent=1 // loop_body
      %s36 = ssub.s32 %s31, 1
      %s37 = ssub.s32 %s31, 2
      %s38 = sadd.s32 %s31, 1
      %s39 = ssub.s32 %s31, %s38
      %p40 = scmp.eq.s32.totalorder %s39, 0
      %s42 = sadd.s32 %s41, 1
      %s43 = scalar_select %p40, %s41, %s42
      %p46 = pneg %p40
      %p47 = scmp.eq.s32.totalorder %s31, 1
      %p48 = por %p46, %p47
      %p49 = scmp.ne.s32.totalorder %s41, %s44
      %p50 = scmp.eq.s32.totalorder %s31, 0
      %p51 = por %p49, %p50
      %p52 = scmp.ne.s32.totalorder %s41, %s44
      %p53 = scmp.eq.s32.totalorder %s36, 1
      %p54 = por %p52, %p53
      %p55 = scmp.ne.s32.totalorder %s44, %s45
      %p56 = scmp.eq.s32.totalorder %s36, 0
      %p57 = por %p55, %p56
      %p58 = scmp.ne.s32.totalorder %s44, %s45
      %p59 = scmp.eq.s32.totalorder %s37, 1
      %p60 = por %p58, %p59
      %p62 = scmp.ne.s32.totalorder %s45, %s61
      %p63 = scmp.eq.s32.totalorder %s37, 0
      %p64 = por %p62, %p63
      %s66 = sadd.s32 %s65, 1
      %p69 = scmp.eq.s32.totalorder %s31, 1
      %p70 = scmp.ne.s32.totalorder %s65, %s67
      %p71 = scmp.eq.s32.totalorder %s31, 0
      %p72 = por %p70, %p71
      %p73 = scmp.ne.s32.totalorder %s65, %s67
      %p74 = scmp.eq.s32.totalorder %s36, 1
      %p75 = por %p73, %p74
      %p76 = scmp.ne.s32.totalorder %s67, %s68
      %p77 = scmp.eq.s32.totalorder %s36, 0
      %p78 = por %p76, %p77
      %p79 = scmp.ne.s32.totalorder %s67, %s68
      %p80 = scmp.eq.s32.totalorder %s37, 1
      %p81 = por %p79, %p80
      %p83 = scmp.ne.s32.totalorder %s68, %s82
      %p84 = scmp.eq.s32.totalorder %s37, 0
      %p85 = por %p83, %p84
      %s87 = sadd.s32 %s86, 1
      %p90 = scmp.eq.s32.totalorder %s31, 1
      %p91 = scmp.ne.s32.totalorder %s86, %s88
      %p92 = scmp.eq.s32.totalorder %s31, 0
      %p93 = por %p91, %p92
      %p94 = scmp.ne.s32.totalorder %s86, %s88
      %p95 = scmp.eq.s32.totalorder %s36, 1
      %p96 = por %p94, %p95
      %p97 = scmp.ne.s32.totalorder %s88, %s89
      %p98 = scmp.eq.s32.totalorder %s36, 0
      %p99 = por %p97, %p98
      %p100 = scmp.ne.s32.totalorder %s88, %s89
      %p101 = scmp.eq.s32.totalorder %s37, 1
      %p102 = por %p100, %p101
      %p104 = scmp.ne.s32.totalorder %s89, %s103
      %p105 = scmp.eq.s32.totalorder %s37, 0
      %p106 = por %p104, %p105
      %s108 = sadd.s32 %s107, 1
      %p111 = scmp.eq.s32.totalorder %s31, 1
      %p112 = scmp.ne.s32.totalorder %s107, %s109
      %p113 = scmp.eq.s32.totalorder %s31, 0
      %p114 = por %p112, %p113
      %p115 = scmp.ne.s32.totalorder %s107, %s109
      %p116 = scmp.eq.s32.totalorder %s36, 1
      %p117 = por %p115, %p116
      %p118 = scmp.ne.s32.totalorder %s109, %s110
      %p119 = scmp.eq.s32.totalorder %s36, 0
      %p120 = por %p118, %p119
      %p121 = scmp.ne.s32.totalorder %s109, %s110
      %p122 = scmp.eq.s32.totalorder %s37, 1
      %p123 = por %p121, %p122
      %p125 = scmp.ne.s32.totalorder %s110, %s124
      %p126 = scmp.eq.s32.totalorder %s37, 0
      %p127 = por %p125, %p126
      %s129 = sadd.s32 %s128, 1
      %p132 = scmp.eq.s32.totalorder %s31, 1
      %p133 = scmp.ne.s32.totalorder %s128, %s130
      %p134 = scmp.eq.s32.totalorder %s31, 0
      %p135 = por %p133, %p134
      %p136 = scmp.ne.s32.totalorder %s128, %s130
      %p137 = scmp.eq.s32.totalorder %s36, 1
      %p138 = por %p136, %p137
      %p139 = scmp.ne.s32.totalorder %s130, %s131
      %p140 = scmp.eq.s32.totalorder %s36, 0
      %p141 = por %p139, %p140
      %p142 = scmp.ne.s32.totalorder %s130, %s131
      %p143 = scmp.eq.s32.totalorder %s37, 1
      %p144 = por %p142, %p143
      %p146 = scmp.ne.s32.totalorder %s131, %s145
      %p147 = scmp.eq.s32.totalorder %s37, 0
      %p148 = por %p146, %p147
      %s150 = sadd.s32 %s149, 1
      %p153 = scmp.eq.s32.totalorder %s31, 1
      %p154 = scmp.ne.s32.totalorder %s149, %s151
      %p155 = scmp.eq.s32.totalorder %s31, 0
      %p156 = por %p154, %p155
      %p157 = scmp.ne.s32.totalorder %s149, %s151
      %p158 = scmp.eq.s32.totalorder %s36, 1
      %p159 = por %p157, %p158
      %p160 = scmp.ne.s32.totalorder %s151, %s152
      %p161 = scmp.eq.s32.totalorder %s36, 0
      %p162 = por %p160, %p161
      %p163 = scmp.ne.s32.totalorder %s151, %s152
      %p164 = scmp.eq.s32.totalorder %s37, 1
      %p165 = por %p163, %p164
      %p167 = scmp.ne.s32.totalorder %s152, %s166
      %p168 = scmp.eq.s32.totalorder %s37, 0
      %p169 = por %p167, %p168
      %s171 = sadd.s32 %s170, 1
      %p174 = scmp.eq.s32.totalorder %s31, 1
      %p175 = scmp.ne.s32.totalorder %s170, %s172
      %p176 = scmp.eq.s32.totalorder %s31, 0
      %p177 = por %p175, %p176
      %p178 = scmp.ne.s32.totalorder %s170, %s172
      %p179 = scmp.eq.s32.totalorder %s36, 1
      %p180 = por %p178, %p179
      %p181 = scmp.ne.s32.totalorder %s172, %s173
      %p182 = scmp.eq.s32.totalorder %s36, 0
      %p183 = por %p181, %p182
      %p184 = scmp.ne.s32.totalorder %s172, %s173
      %p185 = scmp.eq.s32.totalorder %s37, 1
      %p186 = por %p184, %p185
      %p188 = scmp.ne.s32.totalorder %s173, %s187
      %p189 = scmp.eq.s32.totalorder %s37, 0
      %p190 = por %p188, %p189
      %s192 = sadd.s32 %s191, 1
      %p195 = scmp.eq.s32.totalorder %s31, 1
      %p196 = scmp.ne.s32.totalorder %s191, %s193
      %p197 = scmp.eq.s32.totalorder %s31, 0
      %p198 = por %p196, %p197
      %p199 = scmp.ne.s32.totalorder %s191, %s193
      %p200 = scmp.eq.s32.totalorder %s36, 1
      %p201 = por %p199, %p200
      %p202 = scmp.ne.s32.totalorder %s193, %s194
      %p203 = scmp.eq.s32.totalorder %s36, 0
      %p204 = por %p202, %p203
      %p205 = scmp.ne.s32.totalorder %s193, %s194
      %p206 = scmp.eq.s32.totalorder %s37, 1
      %p207 = por %p205, %p206
      %p209 = scmp.ne.s32.totalorder %s194, %s208
      %p210 = scmp.eq.s32.totalorder %s37, 0
      %p211 = por %p209, %p210
      %s213 = sadd.s32 %s212, 1
      %p216 = scmp.eq.s32.totalorder %s31, 1
      %p217 = scmp.ne.s32.totalorder %s212, %s214
      %p218 = scmp.eq.s32.totalorder %s31, 0
      %p219 = por %p217, %p218
      %p220 = scmp.ne.s32.totalorder %s212, %s214
      %p221 = scmp.eq.s32.totalorder %s36, 1
      %p222 = por %p220, %p221
      %p223 = scmp.ne.s32.totalorder %s214, %s215
      %p224 = scmp.eq.s32.totalorder %s36, 0
      %p225 = por %p223, %p224
      %p226 = scmp.ne.s32.totalorder %s214, %s215
      %p227 = scmp.eq.s32.totalorder %s37, 1
      %p228 = por %p226, %p227
      %p230 = scmp.ne.s32.totalorder %s215, %s229
      %p231 = scmp.eq.s32.totalorder %s37, 0
      %p232 = por %p230, %p231
      %s234 = sadd.s32 %s233, 1
      %p237 = scmp.eq.s32.totalorder %s31, 1
      %p238 = scmp.ne.s32.totalorder %s233, %s235
      %p239 = scmp.eq.s32.totalorder %s31, 0
      %p240 = por %p238, %p239
      %p241 = scmp.ne.s32.totalorder %s233, %s235
      %p242 = scmp.eq.s32.totalorder %s36, 1
      %p243 = por %p241, %p242
      %p244 = scmp.ne.s32.totalorder %s235, %s236
      %p245 = scmp.eq.s32.totalorder %s36, 0
      %p246 = por %p244, %p245
      %p247 = scmp.ne.s32.totalorder %s235, %s236
      %p248 = scmp.eq.s32.totalorder %s37, 1
      %p249 = por %p247, %p248
      %p251 = scmp.ne.s32.totalorder %s236, %s250
      %p252 = scmp.eq.s32.totalorder %s37, 0
      %p253 = por %p251, %p252
      %s255 = sadd.s32 %s254, 1
      %p258 = scmp.eq.s32.totalorder %s31, 1
      %p259 = scmp.ne.s32.totalorder %s254, %s256
      %p260 = scmp.eq.s32.totalorder %s31, 0
      %p261 = por %p259, %p260
      %p262 = scmp.ne.s32.totalorder %s254, %s256
      %p263 = scmp.eq.s32.totalorder %s36, 1
      %p264 = por %p262, %p263
      %p265 = scmp.ne.s32.totalorder %s256, %s257
      %p266 = scmp.eq.s32.totalorder %s36, 0
      %p267 = por %p265, %p266
      %p268 = scmp.ne.s32.totalorder %s256, %s257
      %p269 = scmp.eq.s32.totalorder %s37, 1
      %p270 = por %p268, %p269
      %p272 = scmp.ne.s32.totalorder %s257, %s271
      %p273 = scmp.eq.s32.totalorder %s37, 0
      %p274 = por %p272, %p273
      %s276 = sadd.s32 %s275, 1
      %p279 = scmp.eq.s32.totalorder %s31, 1
      %p280 = scmp.ne.s32.totalorder %s275, %s277
      %p281 = scmp.eq.s32.totalorder %s31, 0
      %p282 = por %p280, %p281
      %p283 = scmp.ne.s32.totalorder %s275, %s277
      %p284 = scmp.eq.s32.totalorder %s36, 1
      %p285 = por %p283, %p284
      %p286 = scmp.ne.s32.totalorder %s277, %s278
      %p287 = scmp.eq.s32.totalorder %s36, 0
      %p288 = por %p286, %p287
      %p289 = scmp.ne.s32.totalorder %s277, %s278
      %p290 = scmp.eq.s32.totalorder %s37, 1
      %p291 = por %p289, %p290
      %p293 = scmp.ne.s32.totalorder %s278, %s292
      %p294 = scmp.eq.s32.totalorder %s37, 0
      %p295 = por %p293, %p294
      %s297 = sadd.s32 %s296, 1
      %p300 = scmp.eq.s32.totalorder %s31, 1
      %p301 = scmp.ne.s32.totalorder %s296, %s298
      %p302 = scmp.eq.s32.totalorder %s31, 0
      %p303 = por %p301, %p302
      %p304 = scmp.ne.s32.totalorder %s296, %s298
      %p305 = scmp.eq.s32.totalorder %s36, 1
      %p306 = por %p304, %p305
      %p307 = scmp.ne.s32.totalorder %s298, %s299
      %p308 = scmp.eq.s32.totalorder %s36, 0
      %p309 = por %p307, %p308
      %p310 = scmp.ne.s32.totalorder %s298, %s299
      %p311 = scmp.eq.s32.totalorder %s37, 1
      %p312 = por %p310, %p311
      %p314 = scmp.ne.s32.totalorder %s299, %s313
      %p315 = scmp.eq.s32.totalorder %s37, 0
      %p316 = por %p314, %p315
      %s317 = ssub.s32 %s31, %s38
      %p318 = scmp.eq.s32.totalorder %s317, 0
      %s320 = sadd.s32 %s319, 1
      %s321 = scalar_select %p318, %s319, %s320
      %p324 = pneg %p318
      %p325 = scmp.eq.s32.totalorder %s31, 1
      %p326 = por %p324, %p325
      %p327 = scmp.ne.s32.totalorder %s319, %s322
      %p328 = scmp.eq.s32.totalorder %s31, 0
      %p329 = por %p327, %p328
      %p330 = scmp.ne.s32.totalorder %s319, %s322
      %p331 = scmp.eq.s32.totalorder %s36, 1
      %p332 = por %p330, %p331
      %p333 = scmp.ne.s32.totalorder %s322, %s323
      %p334 = scmp.eq.s32.totalorder %s36, 0
      %p335 = por %p333, %p334
      %p336 = scmp.ne.s32.totalorder %s322, %s323
      %p337 = scmp.eq.s32.totalorder %s37, 1
      %p338 = por %p336, %p337
      %p340 = scmp.ne.s32.totalorder %s323, %s339
      %p341 = scmp.eq.s32.totalorder %s37, 0
      %p342 = por %p340, %p341
      %p343 = scmp.le.s32.totalorder 1, %s31
      %p344 = scmp.lt.s32.totalorder %s31, 3
      %p345 = pnand %p343, %p344
      %p346 = pneg %p345
      // Predicated region
      $region9: #{tpu_custom_call.1} parent=5 // pred_check
        _
      $region10: #{tpu_custom_call.1} parent=5 // pred_check_branch
        %348 = sbr.rel (%p345) target = $region12
      $region11: #{tpu_custom_call.1} parent=5 // pred_region
        %s349 = ssub.s32 %s31, 1
        // Predicated region
        $region13: #{tpu_custom_call.1} parent=11 // pred_check
          %p350 = pneg %p78
        $region14: #{tpu_custom_call.1} parent=11 // pred_check_branch
          %352 = sbr.rel (%p350) target = $region16
        $region15: #{tpu_custom_call.1} parent=11 // pred_region
          %s354 = ssub.s32 256, 256
          %355 = vsyncadd [#allocation6], %s354
          %s356 = sshll.u32 [#allocation5], 4
          %s357 = int_to_ptr.vmem [resolvable:$true] %s356
          %362 = dma.hbm_to_vmem [thread:$0]  %s1, 256, %s357, [#allocation6], 128, 128, 8
        $region16: #{tpu_custom_call.1} parent=11 // pred_fallthru
          _
        // Predicated region
        $region17: #{tpu_custom_call.1} parent=11 // pred_check
          %p363 = pneg %p99
        $region18: #{tpu_custom_call.1} parent=11 // pred_check_branch
          %365 = sbr.rel (%p363) target = $region20
        $region19: #{tpu_custom_call.1} parent=11 // pred_region
          %s367 = ssub.s32 256, 256
          %368 = vsyncadd [#allocation6], %s367
          %s369 = sshll.u32 [#allocation7], 4
          %s370 = int_to_ptr.vmem [resolvable:$true] %s369
          %375 = dma.hbm_to_vmem [thread:$0]  %s2, 256, %s370, [#allocation6], 128, 128, 8
        $region20: #{tpu_custom_call.1} parent=11 // pred_fallthru
          _
        // Predicated region
        $region21: #{tpu_custom_call.1} parent=11 // pred_check
          %p376 = pneg %p120
        $region22: #{tpu_custom_call.1} parent=11 // pred_check_branch
          %378 = sbr.rel (%p376) target = $region24
        $region23: #{tpu_custom_call.1} parent=11 // pred_region
          %s380 = ssub.s32 6144, 6144
          %381 = vsyncadd [#allocation9], %s380
          %s382 = sshll.u32 [#allocation8], 4
          %s383 = int_to_ptr.vmem [resolvable:$true] %s382
          %388 = dma.hbm_to_vmem [thread:$0]  %s3, 6144, %s383, [#allocation9], 128, 128, 8
        $region24: #{tpu_custom_call.1} parent=11 // pred_fallthru
          _
        // Predicated region
        $region25: #{tpu_custom_call.1} parent=11 // pred_check
          %p389 = pneg %p141
        $region26: #{tpu_custom_call.1} parent=11 // pred_check_branch
          %391 = sbr.rel (%p389) target = $region28
        $region27: #{tpu_custom_call.1} parent=11 // pred_region
          %s393 = ssub.s32 16, 16
          %394 = vsyncadd [#allocation9], %s393
          %s396 = sshll.u32 [#allocation10], 4
          %s397 = int_to_ptr.vmem [resolvable:$true] %s396
          %399 = dma.hbm_to_vmem [thread:$0]  %s4, 16, %s397, [#allocation9]
        $region28: #{tpu_custom_call.1} parent=11 // pred_fallthru
          _
        // Predicated region
        $region29: #{tpu_custom_call.1} parent=11 // pred_check
          %p400 = pneg %p162
        $region30: #{tpu_custom_call.1} parent=11 // pred_check_branch
          %402 = sbr.rel (%p400) target = $region32
        $region31: #{tpu_custom_call.1} parent=11 // pred_region
          %s404 = ssub.s32 6144, 6144
          %405 = vsyncadd [#allocation12], %s404
          %s406 = sshll.u32 [#allocation11], 4
          %s407 = int_to_ptr.vmem [resolvable:$true] %s406
          %412 = dma.hbm_to_vmem [thread:$0]  %s5, 6144, %s407, [#allocation12], 128, 128, 8
        $region32: #{tpu_custom_call.1} parent=11 // pred_fallthru
          _
        // Predicated region
        $region33: #{tpu_custom_call.1} parent=11 // pred_check
          %p413 = pneg %p183
        $region34: #{tpu_custom_call.1} parent=11 // pred_check_branch
          %415 = sbr.rel (%p413) target = $region36
        $region35: #{tpu_custom_call.1} parent=11 // pred_region
          %s417 = ssub.s32 16, 16
          %418 = vsyncadd [#allocation12], %s417
          %s420 = sshll.u32 [#allocation13], 4
          %s421 = int_to_ptr.vmem [resolvable:$true] %s420
          %423 = dma.hbm_to_vmem [thread:$0]  %s6, 16, %s421, [#allocation12]
        $region36: #{tpu_custom_call.1} parent=11 // pred_fallthru
          _
        // Predicated region
        $region37: #{tpu_custom_call.1} parent=11 // pred_check
          %p424 = pneg %p204
        $region38: #{tpu_custom_call.1} parent=11 // pred_check_branch
          %426 = sbr.rel (%p424) target = $region40
        $region39: #{tpu_custom_call.1} parent=11 // pred_region
          %s428 = ssub.s32 2048, 2048
          %429 = vsyncadd [#allocation15], %s428
          %s430 = sshll.u32 [#allocation14], 4
          %s431 = int_to_ptr.vmem [resolvable:$true] %s430
          %436 = dma.hbm_to_vmem [thread:$0]  %s7, 2048, %s431, [#allocation15], 128, 128, 8
        $region40: #{tpu_custom_call.1} parent=11 // pred_fallthru
          _
        // Predicated region
        $region41: #{tpu_custom_call.1} parent=11 // pred_check
          %p437 = pneg %p225
        $region42: #{tpu_custom_call.1} parent=11 // pred_check_branch
          %439 = sbr.rel (%p437) target = $region44
        $region43: #{tpu_custom_call.1} parent=11 // pred_region
          %s441 = ssub.s32 16, 16
          %442 = vsyncadd [#allocation15], %s441
          %s444 = sshll.u32 [#allocation16], 4
          %s445 = int_to_ptr.vmem [resolvable:$true] %s444
          %447 = dma.hbm_to_vmem [thread:$0]  %s8, 16, %s445, [#allocation15]
        $region44: #{tpu_custom_call.1} parent=11 // pred_fallthru
          _
        // Predicated region
        $region45: #{tpu_custom_call.1} parent=11 // pred_check
          %p448 = pneg %p246
        $region46: #{tpu_custom_call.1} parent=11 // pred_check_branch
          %450 = sbr.rel (%p448) target = $region48
        $region47: #{tpu_custom_call.1} parent=11 // pred_region
          %s452 = ssub.s32 2048, 2048
          %453 = vsyncadd [#allocation18], %s452
          %s454 = sshll.u32 [#allocation17], 4
          %s455 = int_to_ptr.vmem [resolvable:$true] %s454
          %460 = dma.hbm_to_vmem [thread:$0]  %s9, 2048, %s455, [#allocation18], 128, 128, 8
        $region48: #{tpu_custom_call.1} parent=11 // pred_fallthru
          _
        // Predicated region
        $region49: #{tpu_custom_call.1} parent=11 // pred_check
          %p461 = pneg %p267
        $region50: #{tpu_custom_call.1} parent=11 // pred_check_branch
          %463 = sbr.rel (%p461) target = $region52
        $region51: #{tpu_custom_call.1} parent=11 // pred_region
          %s465 = ssub.s32 16, 16
          %466 = vsyncadd [#allocation18], %s465
          %s468 = sshll.u32 [#allocation19], 4
          %s469 = int_to_ptr.vmem [resolvable:$true] %s468
          %471 = dma.hbm_to_vmem [thread:$0]  %s10, 16, %s469, [#allocation18]
        $region52: #{tpu_custom_call.1} parent=11 // pred_fallthru
          _
        // Predicated region
        $region53: #{tpu_custom_call.1} parent=11 // pred_check
          %p472 = pneg %p288
        $region54: #{tpu_custom_call.1} parent=11 // pred_check_branch
          %474 = sbr.rel (%p472) target = $region56
        $region55: #{tpu_custom_call.1} parent=11 // pred_region
          %s476 = ssub.s32 2048, 2048
          %477 = vsyncadd [#allocation21], %s476
          %s478 = sshll.u32 [#allocation20], 4
          %s479 = int_to_ptr.vmem [resolvable:$true] %s478
          %484 = dma.hbm_to_vmem [thread:$0]  %s11, 2048, %s479, [#allocation21], 128, 128, 8
        $region56: #{tpu_custom_call.1} parent=11 // pred_fallthru
          _
        // Predicated region
        $region57: #{tpu_custom_call.1} parent=11 // pred_check
          %p485 = pneg %p309
        $region58: #{tpu_custom_call.1} parent=11 // pred_check_branch
          %487 = sbr.rel (%p485) target = $region60
        $region59: #{tpu_custom_call.1} parent=11 // pred_region
          %s489 = ssub.s32 16, 16
          %490 = vsyncadd [#allocation21], %s489
          %s492 = sshll.u32 [#allocation22], 4
          %s493 = int_to_ptr.vmem [resolvable:$true] %s492
          %495 = dma.hbm_to_vmem [thread:$0]  %s12, 16, %s493, [#allocation21]
        $region60: #{tpu_custom_call.1} parent=11 // pred_fallthru
          _
      $region12: #{tpu_custom_call.1} parent=5 // pred_fallthru
        _
      %p496 = scmp.lt.s32.totalorder %s31, 2
      // Predicated region
      $region61: #{tpu_custom_call.1} parent=5 // pred_check
        %p497 = pneg %p496
      $region62: #{tpu_custom_call.1} parent=5 // pred_check_branch
        %499 = sbr.rel (%p497) target = $region64
      $region63: #{tpu_custom_call.1} parent=5 // pred_region
        // Predicated region
        $region65: #{tpu_custom_call.1} parent=63 // pred_check
          %p500 = pneg %p51
        $region66: #{tpu_custom_call.1} parent=63 // pred_check_branch
          %502 = sbr.rel (%p500) target = $region68
        $region67: #{tpu_custom_call.1} parent=63 // pred_region
          %s503 = sand.u32 %s41, 1
          %s504 = scalar_lea.sflag [#allocation3], %s503
          %s505 = sand.u32 %s41, 1
          %s506 = smul.addr %s505, 16
          %s507 = scalar_lea.vmem [#allocation2], %s506
          %s508 = smul.u32 2, %s31
          %s510 = ssub.s32 256, 256
          %511 = vsyncadd %s504, %s510
          %s512 = smul.addr %s508, 128
          %s513 = scalar_lea.hbm %s0, %s512
          %s514 = sshll.u32 %s507, 4
          %s515 = int_to_ptr.vmem [resolvable:$true] %s514
          %520 = dma.hbm_to_vmem [thread:$0]  %s513, 256, %s515, %s504, 128, 128, 8
        $region68: #{tpu_custom_call.1} parent=63 // pred_fallthru
          _
      $region64: #{tpu_custom_call.1} parent=5 // pred_fallthru
        _
      %p521 = scmp.le.s32.totalorder 1, %s31
      %p522 = scmp.lt.s32.totalorder %s31, 3
      %p523 = pnand %p521, %p522
      %p524 = pneg %p523
      // Predicated region
      $region69: #{tpu_custom_call.1} parent=5 // pred_check
        _
      $region70: #{tpu_custom_call.1} parent=5 // pred_check_branch
        %526 = sbr.rel (%p523) target = $region72
      $region71: #{tpu_custom_call.1} parent=5 // pred_region
        %s527 = ssub.s32 %s31, 1
        %s528 = sand.u32 %s44, 1
        %s529 = scalar_lea.sflag [#allocation3], %s528
        %s530 = sand.u32 %s44, 1
        %s531 = smul.addr %s530, 16
        %s532 = scalar_lea.vmem [#allocation2], %s531
        // Predicated region
        $region73: #{tpu_custom_call.1} parent=71 // pred_check
          %p533 = pneg %p57
        $region74: #{tpu_custom_call.1} parent=71 // pred_check_branch
          %535 = sbr.rel (%p533) target = $region76
        $region75: #{tpu_custom_call.1} parent=71 // pred_region
          %536 = dma.done %s529, 256
        $region76: #{tpu_custom_call.1} parent=71 // pred_fallthru
          _
        // Predicated region
        $region77: #{tpu_custom_call.1} parent=71 // pred_check
          %p537 = pneg %p78
        $region78: #{tpu_custom_call.1} parent=71 // pred_check_branch
          %539 = sbr.rel (%p537) target = $region80
        $region79: #{tpu_custom_call.1} parent=71 // pred_region
          %540 = dma.done [#allocation6], 256
        $region80: #{tpu_custom_call.1} parent=71 // pred_fallthru
          _
        // Predicated region
        $region81: #{tpu_custom_call.1} parent=71 // pred_check
          %p541 = pneg %p99
        $region82: #{tpu_custom_call.1} parent=71 // pred_check_branch
          %543 = sbr.rel (%p541) target = $region84
        $region83: #{tpu_custom_call.1} parent=71 // pred_region
          %544 = dma.done [#allocation6], 256
        $region84: #{tpu_custom_call.1} parent=71 // pred_fallthru
          _
        // Predicated region
        $region85: #{tpu_custom_call.1} parent=71 // pred_check
          %p545 = pneg %p120
        $region86: #{tpu_custom_call.1} parent=71 // pred_check_branch
          %547 = sbr.rel (%p545) target = $region88
        $region87: #{tpu_custom_call.1} parent=71 // pred_region
          %548 = dma.done [#allocation9], 6144
        $region88: #{tpu_custom_call.1} parent=71 // pred_fallthru
          _
        // Predicated region
        $region89: #{tpu_custom_call.1} parent=71 // pred_check
          %p549 = pneg %p141
        $region90: #{tpu_custom_call.1} parent=71 // pred_check_branch
          %551 = sbr.rel (%p549) target = $region92
        $region91: #{tpu_custom_call.1} parent=71 // pred_region
          %552 = dma.done [#allocation9], 16
        $region92: #{tpu_custom_call.1} parent=71 // pred_fallthru
          _
        // Predicated region
        $region93: #{tpu_custom_call.1} parent=71 // pred_check
          %p553 = pneg %p162
        $region94: #{tpu_custom_call.1} parent=71 // pred_check_branch
          %555 = sbr.rel (%p553) target = $region96
        $region95: #{tpu_custom_call.1} parent=71 // pred_region
          %556 = dma.done [#allocation12], 6144
        $region96: #{tpu_custom_call.1} parent=71 // pred_fallthru
          _
        // Predicated region
        $region97: #{tpu_custom_call.1} parent=71 // pred_check
          %p557 = pneg %p183
        $region98: #{tpu_custom_call.1} parent=71 // pred_check_branch
          %559 = sbr.rel (%p557) target = $region100
        $region99: #{tpu_custom_call.1} parent=71 // pred_region
          %560 = dma.done [#allocation12], 16
        $region100: #{tpu_custom_call.1} parent=71 // pred_fallthru
          _
        // Predicated region
        $region101: #{tpu_custom_call.1} parent=71 // pred_check
          %p561 = pneg %p204
        $region102: #{tpu_custom_call.1} parent=71 // pred_check_branch
          %563 = sbr.rel (%p561) target = $region104
        $region103: #{tpu_custom_call.1} parent=71 // pred_region
          %564 = dma.done [#allocation15], 2048
        $region104: #{tpu_custom_call.1} parent=71 // pred_fallthru
          _
        // Predicated region
        $region105: #{tpu_custom_call.1} parent=71 // pred_check
          %p565 = pneg %p225
        $region106: #{tpu_custom_call.1} parent=71 // pred_check_branch
          %567 = sbr.rel (%p565) target = $region108
        $region107: #{tpu_custom_call.1} parent=71 // pred_region
          %568 = dma.done [#allocation15], 16
        $region108: #{tpu_custom_call.1} parent=71 // pred_fallthru
          _
        // Predicated region
        $region109: #{tpu_custom_call.1} parent=71 // pred_check
          %p569 = pneg %p246
        $region110: #{tpu_custom_call.1} parent=71 // pred_check_branch
          %571 = sbr.rel (%p569) target = $region112
        $region111: #{tpu_custom_call.1} parent=71 // pred_region
          %572 = dma.done [#allocation18], 2048
        $region112: #{tpu_custom_call.1} parent=71 // pred_fallthru
          _
        // Predicated region
        $region113: #{tpu_custom_call.1} parent=71 // pred_check
          %p573 = pneg %p267
        $region114: #{tpu_custom_call.1} parent=71 // pred_check_branch
          %575 = sbr.rel (%p573) target = $region116
        $region115: #{tpu_custom_call.1} parent=71 // pred_region
          %576 = dma.done [#allocation18], 16
        $region116: #{tpu_custom_call.1} parent=71 // pred_fallthru
          _
        // Predicated region
        $region117: #{tpu_custom_call.1} parent=71 // pred_check
          %p577 = pneg %p288
        $region118: #{tpu_custom_call.1} parent=71 // pred_check_branch
          %579 = sbr.rel (%p577) target = $region120
        $region119: #{tpu_custom_call.1} parent=71 // pred_region
          %580 = dma.done [#allocation21], 2048
        $region120: #{tpu_custom_call.1} parent=71 // pred_fallthru
          _
        // Predicated region
        $region121: #{tpu_custom_call.1} parent=71 // pred_check
          %p581 = pneg %p309
        $region122: #{tpu_custom_call.1} parent=71 // pred_check_branch
          %583 = sbr.rel (%p581) target = $region124
        $region123: #{tpu_custom_call.1} parent=71 // pred_region
          %584 = dma.done [#allocation21], 16
        $region124: #{tpu_custom_call.1} parent=71 // pred_fallthru
          _
        %s585 = sand.u32 %s44, 1
        %s586 = scalar_lea.sflag [#allocation3], %s585
        %s587 = sand.u32 %s44, 1
        %s588 = smul.addr %s587, 16
        %s589 = scalar_lea.vmem [#allocation2], %s588
        %p590 = pneg %p57
        %p591 = pneg %p54
        %p592 = pneg %p78
        %p593 = pneg %p75
        %p594 = pneg %p99
        %p595 = pneg %p96
        %p596 = pneg %p120
        %p597 = pneg %p117
        %p598 = pneg %p141
        %p599 = pneg %p138
        %p600 = pneg %p162
        %p601 = pneg %p159
        %p602 = pneg %p183
        %p603 = pneg %p180
        %p604 = pneg %p204
        %p605 = pneg %p201
        %p606 = pneg %p225
        %p607 = pneg %p222
        %p608 = pneg %p246
        %p609 = pneg %p243
        %p610 = pneg %p267
        %p611 = pneg %p264
        %p612 = pneg %p288
        %p613 = pneg %p285
        %p614 = pneg %p309
        %p615 = pneg %p306
        %p616 = pneg %p335
        %p617 = pneg %p332
        %s618 = sand.u32 %s322, 1
        %s619 = scalar_lea.sflag [#allocation4], %s618
        %s620 = sand.u32 %s322, 1
        %s621 = smul.addr %s620, 16
        %s622 = scalar_lea.vmem [#allocation23], %s621
        %s623 = smul.u32 2, %s36
        %s624 = smul.u32 2, %s36
        %v625 = vld [vmem:[%s532] sm:$0xff]
        %v626 = vld [vmem:[%s532 + $0x8] sm:$0xff]
        %v627 = vld [vmem:[#allocation5] sm:$0xff]
        %v628 = vld [vmem:[#allocation5 + $0x8] sm:$0xff]
        %v629 = vld [vmem:[#allocation7] sm:$0xff]
        %v630 = vld [vmem:[#allocation7 + $0x8] sm:$0xff]
        %v631 = vld [vmem:[#allocation8] sm:$0xff]
        %v632 = vld [vmem:[#allocation8 + $0x8] sm:$0xff]
        %v633 = vld [vmem:[#allocation8 + $0x10] sm:$0xff]
        %v634 = vld [vmem:[#allocation8 + $0x18] sm:$0xff]
        %v635 = vld [vmem:[#allocation8 + $0x20] sm:$0xff]
        %v636 = vld [vmem:[#allocation8 + $0x28] sm:$0xff]
        %v637 = vld [vmem:[#allocation8 + $0x30] sm:$0xff]
        %v638 = vld [vmem:[#allocation8 + $0x38] sm:$0xff]
        %v639 = vld [vmem:[#allocation8 + $0x40] sm:$0xff]
        %v640 = vld [vmem:[#allocation8 + $0x48] sm:$0xff]
        %v641 = vld [vmem:[#allocation8 + $0x50] sm:$0xff]
        %v642 = vld [vmem:[#allocation8 + $0x58] sm:$0xff]
        %v643 = vld [vmem:[#allocation8 + $0x60] sm:$0xff]
        %v644 = vld [vmem:[#allocation8 + $0x68] sm:$0xff]
        %v645 = vld [vmem:[#allocation8 + $0x70] sm:$0xff]
        %v646 = vld [vmem:[#allocation8 + $0x78] sm:$0xff]
        %647 = vmatprep.subr.mxu0 0.0
        %648 = vmatpush1.msra.mxu0 %v631
        %649 = vmatprep.subr.mxu0 0.0
        %650 = vmatpush1.msra.mxu0 %v632
        %651 = vmatprep.subr.mxu0 0.0
        %652 = vmatpush1.msra.mxu0 %v633
        %653 = vmatprep.subr.mxu0 0.0
        %654 = vmatpush1.msra.mxu0 %v634
        %655 = vmatprep.subr.mxu0 0.0
        %656 = vmatpush1.msra.mxu0 %v635
        %657 = vmatprep.subr.mxu0 0.0
        %658 = vmatpush1.msra.mxu0 %v636
        %659 = vmatprep.subr.mxu0 0.0
        %660 = vmatpush1.msra.mxu0 %v637
        %661 = vmatprep.subr.mxu0 0.0
        %662 = vmatpush1.msra.mxu0 %v638
        %663 = vmatprep.subr.mxu0 0.0
        %664 = vmatpush1.msra.mxu0 %v639
        %665 = vmatprep.subr.mxu0 0.0
        %666 = vmatpush1.msra.mxu0 %v640
        %667 = vmatprep.subr.mxu0 0.0
        %668 = vmatpush1.msra.mxu0 %v641
        %669 = vmatprep.subr.mxu0 0.0
        %670 = vmatpush1.msra.mxu0 %v642
        %671 = vmatprep.subr.mxu0 0.0
        %672 = vmatpush1.msra.mxu0 %v643
        %673 = vmatprep.subr.mxu0 0.0
        %674 = vmatpush1.msra.mxu0 %v644
        %675 = vmatprep.subr.mxu0 0.0
        %676 = vmatpush1.msra.mxu0 %v645
        %677 = vmatprep.subr.mxu0 0.0
        %678 = vmatpush1.msra.mxu0 %v646
        %679 = vmatprep.subr.mxu0 0.0
        %680 = vmatpush1.msra.mxu0 0.0
        %681 = vmatprep.subr.mxu0 0.0
        %682 = vmatpush1.msra.mxu0 0.0
        %683 = vmatprep.subr.mxu0 0.0
        %684 = vmatpush1.msra.mxu0 0.0
        %685 = vmatprep.subr.mxu0 0.0
        %686 = vmatpush1.msra.mxu0 0.0
        %687 = vmatprep.subr.mxu0 0.0
        %688 = vmatpush1.msra.mxu0 0.0
        %689 = vmatprep.subr.mxu0 0.0
        %690 = vmatpush1.msra.mxu0 0.0
        %691 = vmatprep.subr.mxu0 0.0
        %692 = vmatpush1.msra.mxu0 0.0
        %693 = vmatprep.subr.mxu0 0.0
        %694 = vmatpush1.msra.mxu0 0.0
        %695 = vmatprep.subr.mxu0 0.0
        %696 = vmatpush1.msra.mxu0 0.0
        %697 = vmatprep.subr.mxu0 0.0
        %698 = vmatpush1.msra.mxu0 0.0
        %699 = vmatprep.subr.mxu0 0.0
        %700 = vmatpush1.msra.mxu0 0.0
        %701 = vmatprep.subr.mxu0 0.0
        %702 = vmatpush1.msra.mxu0 0.0
        %703 = vmatprep.subr.mxu0 0.0
        %704 = vmatpush1.msra.mxu0 0.0
        %705 = vmatprep.subr.mxu0 0.0
        %706 = vmatpush1.msra.mxu0 0.0
        %707 = vmatprep.subr.mxu0 0.0
        %708 = vmatpush1.msra.mxu0 0.0
        %709 = vmatprep.subr.mxu0 0.0
        %710 = vmatpush1.msra.mxu0 0.0
        %711 = vmatprep.mubr.f32.mxu0 0.0
        %712 = vmatmul.mubr.f32.gmra.mrb[0].mxu0 %v625
        %v713 = vpop.f32.mrb[0].mxu0
        %v714 = vadd.f32 0.0, %v713
        %v715 = vpop.f32.mrb[0].mxu0
        %716 = vmatprep.mubr.f32.mxu0 0.0
        %717 = vmatmul.mubr.f32.gmra.mrb[0].mxu0 %v626
        %v718 = vpop.f32.mrb[0].mxu0
        %v719 = vadd.f32 0.0, %v718
        %v720 = vpop.f32.mrb[0].mxu0
        %721 = vdwg.mxu0
        %s722 = scalar_lea.vmem [#allocation8], 128
        %v723 = vld [vmem:[%s722] sm:$0xff]
        %v724 = vld [vmem:[%s722 + $0x8] sm:$0xff]
        %v725 = vld [vmem:[%s722 + $0x10] sm:$0xff]
        %v726 = vld [vmem:[%s722 + $0x18] sm:$0xff]
        %v727 = vld [vmem:[%s722 + $0x20] sm:$0xff]
        %v728 = vld [vmem:[%s722 + $0x28] sm:$0xff]
        %v729 = vld [vmem:[%s722 + $0x30] sm:$0xff]
        %v730 = vld [vmem:[%s722 + $0x38] sm:$0xff]
        %v731 = vld [vmem:[%s722 + $0x40] sm:$0xff]
        %v732 = vld [vmem:[%s722 + $0x48] sm:$0xff]
        %v733 = vld [vmem:[%s722 + $0x50] sm:$0xff]
        %v734 = vld [vmem:[%s722 + $0x58] sm:$0xff]
        %v735 = vld [vmem:[%s722 + $0x60] sm:$0xff]
        %v736 = vld [vmem:[%s722 + $0x68] sm:$0xff]
        %v737 = vld [vmem:[%s722 + $0x70] sm:$0xff]
        %v738 = vld [vmem:[%s722 + $0x78] sm:$0xff]
        %s739 = scalar_lea.vmem [#allocation8], 256
        %v740 = vld [vmem:[%s739] sm:$0xff]
        %v741 = vld [vmem:[%s739 + $0x8] sm:$0xff]
        %v742 = vld [vmem:[%s739 + $0x10] sm:$0xff]
        %v743 = vld [vmem:[%s739 + $0x18] sm:$0xff]
        %v744 = vld [vmem:[%s739 + $0x20] sm:$0xff]
        %v745 = vld [vmem:[%s739 + $0x28] sm:$0xff]
        %v746 = vld [vmem:[%s739 + $0x30] sm:$0xff]
        %v747 = vld [vmem:[%s739 + $0x38] sm:$0xff]
        %v748 = vld [vmem:[%s739 + $0x40] sm:$0xff]
        %v749 = vld [vmem:[%s739 + $0x48] sm:$0xff]
        %v750 = vld [vmem:[%s739 + $0x50] sm:$0xff]
        %v751 = vld [vmem:[%s739 + $0x58] sm:$0xff]
        %v752 = vld [vmem:[%s739 + $0x60] sm:$0xff]
        %v753 = vld [vmem:[%s739 + $0x68] sm:$0xff]
        %v754 = vld [vmem:[%s739 + $0x70] sm:$0xff]
        %v755 = vld [vmem:[%s739 + $0x78] sm:$0xff]
        %756 = vmatprep.subr.mxu0 0.0
        %757 = vmatpush1.msra.mxu0 %v740
        %758 = vmatprep.subr.mxu0 0.0
        %759 = vmatpush1.msra.mxu0 %v741
        %760 = vmatprep.subr.mxu0 0.0
        %761 = vmatpush1.msra.mxu0 %v742
        %762 = vmatprep.subr.mxu0 0.0
        %763 = vmatpush1.msra.mxu0 %v743
        %764 = vmatprep.subr.mxu0 0.0
        %765 = vmatpush1.msra.mxu0 %v744
        %766 = vmatprep.subr.mxu0 0.0
        %767 = vmatpush1.msra.mxu0 %v745
        %768 = vmatprep.subr.mxu0 0.0
        %769 = vmatpush1.msra.mxu0 %v746
        %770 = vmatprep.subr.mxu0 0.0
        %771 = vmatpush1.msra.mxu0 %v747
        %772 = vmatprep.subr.mxu0 0.0
        %773 = vmatpush1.msra.mxu0 %v748
        %774 = vmatprep.subr.mxu0 0.0
        %775 = vmatpush1.msra.mxu0 %v749
        %776 = vmatprep.subr.mxu0 0.0
        %777 = vmatpush1.msra.mxu0 %v750
        %778 = vmatprep.subr.mxu0 0.0
        %779 = vmatpush1.msra.mxu0 %v751
        %780 = vmatprep.subr.mxu0 0.0
        %781 = vmatpush1.msra.mxu0 %v752
        %782 = vmatprep.subr.mxu0 0.0
        %783 = vmatpush1.msra.mxu0 %v753
        %784 = vmatprep.subr.mxu0 0.0
        %785 = vmatpush1.msra.mxu0 %v754
        %786 = vmatprep.subr.mxu0 0.0
        %787 = vmatpush1.msra.mxu0 %v755
        %788 = vmatprep.subr.mxu0 0.0
        %789 = vmatpush1.msra.mxu0 0.0
        %790 = vmatprep.subr.mxu0 0.0
        %791 = vmatpush1.msra.mxu0 0.0
        %792 = vmatprep.subr.mxu0 0.0
        %793 = vmatpush1.msra.mxu0 0.0
        %794 = vmatprep.subr.mxu0 0.0
        %795 = vmatpush1.msra.mxu0 0.0
        %796 = vmatprep.subr.mxu0 0.0
        %797 = vmatpush1.msra.mxu0 0.0
        %798 = vmatprep.subr.mxu0 0.0
        %799 = vmatpush1.msra.mxu0 0.0
        %800 = vmatprep.subr.mxu0 0.0
        %801 = vmatpush1.msra.mxu0 0.0
        %802 = vmatprep.subr.mxu0 0.0
        %803 = vmatpush1.msra.mxu0 0.0
        %804 = vmatprep.subr.mxu0 0.0
        %805 = vmatpush1.msra.mxu0 0.0
        %806 = vmatprep.subr.mxu0 0.0
        %807 = vmatpush1.msra.mxu0 0.0
        %808 = vmatprep.subr.mxu0 0.0
        %809 = vmatpush1.msra.mxu0 0.0
        %810 = vmatprep.subr.mxu0 0.0
        %811 = vmatpush1.msra.mxu0 0.0
        %812 = vmatprep.subr.mxu0 0.0
        %813 = vmatpush1.msra.mxu0 0.0
        %814 = vmatprep.subr.mxu0 0.0
        %815 = vmatpush1.msra.mxu0 0.0
        %816 = vmatprep.subr.mxu0 0.0
        %817 = vmatpush1.msra.mxu0 0.0
        %818 = vmatprep.subr.mxu0 0.0
        %819 = vmatpush1.msra.mxu0 0.0
        %820 = vmatprep.mubr.f32.mxu0 0.0
        %821 = vmatmul.mubr.f32.gmra.mrb[0].mxu0 %v625
        %v822 = vpop.f32.mrb[0].mxu0
        %v823 = vadd.f32 0.0, %v822
        %v824 = vpop.f32.mrb[0].mxu0
        %825 = vmatprep.mubr.f32.mxu0 0.0
        %826 = vmatmul.mubr.f32.gmra.mrb[0].mxu0 %v626
        %v827 = vpop.f32.mrb[0].mxu0
        %v828 = vadd.f32 0.0, %v827
        %v829 = vpop.f32.mrb[0].mxu0
        %830 = vdwg.mxu0
        %v831 = vrot.slane %v714, 7
        %v832 = vrot.slane %v719, 7
        %v833 = vlaneseq
        %v834 = vshrl.u32 %v833, 7
        %vm835 = vcmp.lt.s32.totalorder %v834, 1
        %v836 = vsel %vm835, %v831, %v832
        %v837 = vsel %vm835, %v832, %v831
        %839 = vset.pattern.permute.xlu0 0
        %840 = vperm.xlu0 %839, %v627
        %v841 = vpop.permute.xlu0 %840
        %844 = vset.pattern.permute.xlu0 0
        %845 = vperm.xlu0 %844, %v628
        %v846 = vpop.permute.xlu0 %845
        %v848 = vmul.f32 %v837, %v841
        %v849 = vmul.f32 %v836, %v846
        %850 = vmatprep.subr.mxu0 0.0
        %851 = vmatpush1.msra.mxu0 %v723
        %852 = vmatprep.subr.mxu0 0.0
        %853 = vmatpush1.msra.mxu0 %v724
        %854 = vmatprep.subr.mxu0 0.0
        %855 = vmatpush1.msra.mxu0 %v725
        %856 = vmatprep.subr.mxu0 0.0
        %857 = vmatpush1.msra.mxu0 %v726
        %858 = vmatprep.subr.mxu0 0.0
        %859 = vmatpush1.msra.mxu0 %v727
        %860 = vmatprep.subr.mxu0 0.0
        %861 = vmatpush1.msra.mxu0 %v728
        %862 = vmatprep.subr.mxu0 0.0
        %863 = vmatpush1.msra.mxu0 %v729
        %864 = vmatprep.subr.mxu0 0.0
        %865 = vmatpush1.msra.mxu0 %v730
        %866 = vmatprep.subr.mxu0 0.0
        %867 = vmatpush1.msra.mxu0 %v731
        %868 = vmatprep.subr.mxu0 0.0
        %869 = vmatpush1.msra.mxu0 %v732
        %870 = vmatprep.subr.mxu0 0.0
        %871 = vmatpush1.msra.mxu0 %v733
        %872 = vmatprep.subr.mxu0 0.0
        %873 = vmatpush1.msra.mxu0 %v734
        %874 = vmatprep.subr.mxu0 0.0
        %875 = vmatpush1.msra.mxu0 %v735
        %876 = vmatprep.subr.mxu0 0.0
        %877 = vmatpush1.msra.mxu0 %v736
        %878 = vmatprep.subr.mxu0 0.0
        %879 = vmatpush1.msra.mxu0 %v737
        %880 = vmatprep.subr.mxu0 0.0
        %881 = vmatpush1.msra.mxu0 %v738
        %882 = vmatprep.subr.mxu0 0.0
        %883 = vmatpush1.msra.mxu0 0.0
        %884 = vmatprep.subr.mxu0 0.0
        %885 = vmatpush1.msra.mxu0 0.0
        %886 = vmatprep.subr.mxu0 0.0
        %887 = vmatpush1.msra.mxu0 0.0
        %888 = vmatprep.subr.mxu0 0.0
        %889 = vmatpush1.msra.mxu0 0.0
        %890 = vmatprep.subr.mxu0 0.0
        %891 = vmatpush1.msra.mxu0 0.0
        %892 = vmatprep.subr.mxu0 0.0
        %893 = vmatpush1.msra.mxu0 0.0
        %894 = vmatprep.subr.mxu0 0.0
        %895 = vmatpush1.msra.mxu0 0.0
        %896 = vmatprep.subr.mxu0 0.0
        %897 = vmatpush1.msra.mxu0 0.0
        %898 = vmatprep.subr.mxu0 0.0
        %899 = vmatpush1.msra.mxu0 0.0
        %900 = vmatprep.subr.mxu0 0.0
        %901 = vmatpush1.msra.mxu0 0.0
        %902 = vmatprep.subr.mxu0 0.0
        %903 = vmatpush1.msra.mxu0 0.0
        %904 = vmatprep.subr.mxu0 0.0
        %905 = vmatpush1.msra.mxu0 0.0
        %906 = vmatprep.subr.mxu0 0.0
        %907 = vmatpush1.msra.mxu0 0.0
        %908 = vmatprep.subr.mxu0 0.0
        %909 = vmatpush1.msra.mxu0 0.0
        %910 = vmatprep.subr.mxu0 0.0
        %911 = vmatpush1.msra.mxu0 0.0
        %912 = vmatprep.subr.mxu0 0.0
        %913 = vmatpush1.msra.mxu0 0.0
        %914 = vmatprep.mubr.f32.mxu0 0.0
        %915 = vmatmul.mubr.f32.gmra.mrb[0].mxu0 %v625
        %v916 = vpop.f32.mrb[0].mxu0
        %v917 = vadd.f32 %v848, %v916
        %v918 = vpop.f32.mrb[0].mxu0
        %919 = vmatprep.mubr.f32.mxu0 0.0
        %920 = vmatmul.mubr.f32.gmra.mrb[0].mxu0 %v626
        %v921 = vpop.f32.mrb[0].mxu0
        %v922 = vadd.f32 %v849, %v921
        %v923 = vpop.f32.mrb[0].mxu0
        %924 = vdwg.mxu0
        %v925 = vrot.slane %v823, 1
        %v926 = vrot.slane %v828, 1
        %vm927 = vcmp.lt.s32.totalorder %v834, 7
        %v928 = vsel %vm927, %v925, %v926
        %v929 = vsel %vm927, %v926, %v925
        %931 = vset.pattern.permute.xlu0 0
        %932 = vperm.xlu0 %931, %v629
        %v933 = vpop.permute.xlu0 %932
        %936 = vset.pattern.permute.xlu0 0
        %937 = vperm.xlu0 %936, %v630
        %v938 = vpop.permute.xlu0 %937
        %v940 = vmul.f32 %v928, %v933
        %v941 = vmul.f32 %v929, %v938
        %v942 = vadd.f32 %v917, %v940
        %v943 = vadd.f32 %v922, %v941
        %v944 = vld [vmem:[#allocation10] sm:$0x1]
        %v946 = vlaneseq
        %v947 = vshrl.u32 %v946, 7
        %v948 = vsub.s32 0, %v947
        %v949 = vrot.slane %v944, %v948
        %v951 = vadd.f32 %v942, %v949
        %v952 = vadd.f32 %v943, %v949
        %v953 = vxor.u32 %v951, 2147483648
        %v954 = vxor.u32 %v952, 2147483648
        %v955 = vmul.f32 %v953, 1.442695
        %v956 = vpow.pop %v955
        %v957 = vmul.f32 %v954, 1.442695
        %v958 = vpow.pop %v957
        %v959 = vadd.f32 %v956, 1.0
        %v960 = vadd.f32 %v958, 1.0
        %v961 = vrcp.pop %v959
        %v962 = vmul.f32 1.0, %v961
        %v963 = vrcp.pop %v960
        %v964 = vmul.f32 1.0, %v963
        %v965 = vmul.f32 %v951, %v962
        %v966 = vmul.f32 %v952, %v964
        %v967 = vld [vmem:[#allocation11] sm:$0xff]
        %v968 = vld [vmem:[#allocation11 + $0x8] sm:$0xff]
        %v969 = vld [vmem:[#allocation11 + $0x10] sm:$0xff]
        %v970 = vld [vmem:[#allocation11 + $0x18] sm:$0xff]
        %v971 = vld [vmem:[#allocation11 + $0x20] sm:$0xff]
        %v972 = vld [vmem:[#allocation11 + $0x28] sm:$0xff]
        %v973 = vld [vmem:[#allocation11 + $0x30] sm:$0xff]
        %v974 = vld [vmem:[#allocation11 + $0x38] sm:$0xff]
        %v975 = vld [vmem:[#allocation11 + $0x40] sm:$0xff]
        %v976 = vld [vmem:[#allocation11 + $0x48] sm:$0xff]
        %v977 = vld [vmem:[#allocation11 + $0x50] sm:$0xff]
        %v978 = vld [vmem:[#allocation11 + $0x58] sm:$0xff]
        %v979 = vld [vmem:[#allocation11 + $0x60] sm:$0xff]
        %v980 = vld [vmem:[#allocation11 + $0x68] sm:$0xff]
        %v981 = vld [vmem:[#allocation11 + $0x70] sm:$0xff]
        %v982 = vld [vmem:[#allocation11 + $0x78] sm:$0xff]
        %983 = vmatprep.subr.mxu0 0.0
        %984 = vmatpush1.msra.mxu0 %v967
        %985 = vmatprep.subr.mxu0 0.0
        %986 = vmatpush1.msra.mxu0 %v968
        %987 = vmatprep.subr.mxu0 0.0
        %988 = vmatpush1.msra.mxu0 %v969
        %989 = vmatprep.subr.mxu0 0.0
        %990 = vmatpush1.msra.mxu0 %v970
        %991 = vmatprep.subr.mxu0 0.0
        %992 = vmatpush1.msra.mxu0 %v971
        %993 = vmatprep.subr.mxu0 0.0
        %994 = vmatpush1.msra.mxu0 %v972
        %995 = vmatprep.subr.mxu0 0.0
        %996 = vmatpush1.msra.mxu0 %v973
        %997 = vmatprep.subr.mxu0 0.0
        %998 = vmatpush1.msra.mxu0 %v974
        %999 = vmatprep.subr.mxu0 0.0
        %1000 = vmatpush1.msra.mxu0 %v975
        %1001 = vmatprep.subr.mxu0 0.0
        %1002 = vmatpush1.msra.mxu0 %v976
        %1003 = vmatprep.subr.mxu0 0.0
        %1004 = vmatpush1.msra.mxu0 %v977
        %1005 = vmatprep.subr.mxu0 0.0
        %1006 = vmatpush1.msra.mxu0 %v978
        %1007 = vmatprep.subr.mxu0 0.0
        %1008 = vmatpush1.msra.mxu0 %v979
        %1009 = vmatprep.subr.mxu0 0.0
        %1010 = vmatpush1.msra.mxu0 %v980
        %1011 = vmatprep.subr.mxu0 0.0
        %1012 = vmatpush1.msra.mxu0 %v981
        %1013 = vmatprep.subr.mxu0 0.0
        %1014 = vmatpush1.msra.mxu0 %v982
        %1015 = vmatprep.subr.mxu0 0.0
        %1016 = vmatpush1.msra.mxu0 0.0
        %1017 = vmatprep.subr.mxu0 0.0
        %1018 = vmatpush1.msra.mxu0 0.0
        %1019 = vmatprep.subr.mxu0 0.0
        %1020 = vmatpush1.msra.mxu0 0.0
        %1021 = vmatprep.subr.mxu0 0.0
        %1022 = vmatpush1.msra.mxu0 0.0
        %1023 = vmatprep.subr.mxu0 0.0
        %1024 = vmatpush1.msra.mxu0 0.0
        %1025 = vmatprep.subr.mxu0 0.0
        %1026 = vmatpush1.msra.mxu0 0.0
        %1027 = vmatprep.subr.mxu0 0.0
        %1028 = vmatpush1.msra.mxu0 0.0
        %1029 = vmatprep.subr.mxu0 0.0
        %1030 = vmatpush1.msra.mxu0 0.0
        %1031 = vmatprep.subr.mxu0 0.0
        %1032 = vmatpush1.msra.mxu0 0.0
        %1033 = vmatprep.subr.mxu0 0.0
        %1034 = vmatpush1.msra.mxu0 0.0
        %1035 = vmatprep.subr.mxu0 0.0
        %1036 = vmatpush1.msra.mxu0 0.0
        %1037 = vmatprep.subr.mxu0 0.0
        %1038 = vmatpush1.msra.mxu0 0.0
        %1039 = vmatprep.subr.mxu0 0.0
        %1040 = vmatpush1.msra.mxu0 0.0
        %1041 = vmatprep.subr.mxu0 0.0
        %1042 = vmatpush1.msra.mxu0 0.0
        %1043 = vmatprep.subr.mxu0 0.0
        %1044 = vmatpush1.msra.mxu0 0.0
        %1045 = vmatprep.subr.mxu0 0.0
        %1046 = vmatpush1.msra.mxu0 0.0
        %1047 = vmatprep.mubr.f32.mxu0 0.0
        %1048 = vmatmul.mubr.f32.gmra.mrb[0].mxu0 %v965
        %v1049 = vpop.f32.mrb[0].mxu0
        %v1050 = vadd.f32 0.0, %v1049
        %v1051 = vpop.f32.mrb[0].mxu0
        %1052 = vmatprep.mubr.f32.mxu0 0.0
        %1053 = vmatmul.mubr.f32.gmra.mrb[0].mxu0 %v966
        %v1054 = vpop.f32.mrb[0].mxu0
        %v1055 = vadd.f32 0.0, %v1054
        %v1056 = vpop.f32.mrb[0].mxu0
        %1057 = vdwg.mxu0
        %s1058 = scalar_lea.vmem [#allocation11], 128
        %v1059 = vld [vmem:[%s1058] sm:$0xff]
        %v1060 = vld [vmem:[%s1058 + $0x8] sm:$0xff]
        %v1061 = vld [vmem:[%s1058 + $0x10] sm:$0xff]
        %v1062 = vld [vmem:[%s1058 + $0x18] sm:$0xff]
        %v1063 = vld [vmem:[%s1058 + $0x20] sm:$0xff]
        %v1064 = vld [vmem:[%s1058 + $0x28] sm:$0xff]
        %v1065 = vld [vmem:[%s1058 + $0x30] sm:$0xff]
        %v1066 = vld [vmem:[%s1058 + $0x38] sm:$0xff]
        %v1067 = vld [vmem:[%s1058 + $0x40] sm:$0xff]
        %v1068 = vld [vmem:[%s1058 + $0x48] sm:$0xff]
        %v1069 = vld [vmem:[%s1058 + $0x50] sm:$0xff]
        %v1070 = vld [vmem:[%s1058 + $0x58] sm:$0xff]
        %v1071 = vld [vmem:[%s1058 + $0x60] sm:$0xff]
        %v1072 = vld [vmem:[%s1058 + $0x68] sm:$0xff]
        %v1073 = vld [vmem:[%s1058 + $0x70] sm:$0xff]
        %v1074 = vld [vmem:[%s1058 + $0x78] sm:$0xff]
        %s1075 = scalar_lea.vmem [#allocation11], 256
        %v1076 = vld [vmem:[%s1075] sm:$0xff]
        %v1077 = vld [vmem:[%s1075 + $0x8] sm:$0xff]
        %v1078 = vld [vmem:[%s1075 + $0x10] sm:$0xff]
        %v1079 = vld [vmem:[%s1075 + $0x18] sm:$0xff]
        %v1080 = vld [vmem:[%s1075 + $0x20] sm:$0xff]
        %v1081 = vld [vmem:[%s1075 + $0x28] sm:$0xff]
        %v1082 = vld [vmem:[%s1075 + $0x30] sm:$0xff]
        %v1083 = vld [vmem:[%s1075 + $0x38] sm:$0xff]
        %v1084 = vld [vmem:[%s1075 + $0x40] sm:$0xff]
        %v1085 = vld [vmem:[%s1075 + $0x48] sm:$0xff]
        %v1086 = vld [vmem:[%s1075 + $0x50] sm:$0xff]
        %v1087 = vld [vmem:[%s1075 + $0x58] sm:$0xff]
        %v1088 = vld [vmem:[%s1075 + $0x60] sm:$0xff]
        %v1089 = vld [vmem:[%s1075 + $0x68] sm:$0xff]
        %v1090 = vld [vmem:[%s1075 + $0x70] sm:$0xff]
        %v1091 = vld [vmem:[%s1075 + $0x78] sm:$0xff]
        %1092 = vmatprep.subr.mxu0 0.0
        %1093 = vmatpush1.msra.mxu0 %v1076
        %1094 = vmatprep.subr.mxu0 0.0
        %1095 = vmatpush1.msra.mxu0 %v1077
        %1096 = vmatprep.subr.mxu0 0.0
        %1097 = vmatpush1.msra.mxu0 %v1078
        %1098 = vmatprep.subr.mxu0 0.0
        %1099 = vmatpush1.msra.mxu0 %v1079
        %1100 = vmatprep.subr.mxu0 0.0
        %1101 = vmatpush1.msra.mxu0 %v1080
        %1102 = vmatprep.subr.mxu0 0.0
        %1103 = vmatpush1.msra.mxu0 %v1081
        %1104 = vmatprep.subr.mxu0 0.0
        %1105 = vmatpush1.msra.mxu0 %v1082
        %1106 = vmatprep.subr.mxu0 0.0
        %1107 = vmatpush1.msra.mxu0 %v1083
        %1108 = vmatprep.subr.mxu0 0.0
        %1109 = vmatpush1.msra.mxu0 %v1084
        %1110 = vmatprep.subr.mxu0 0.0
        %1111 = vmatpush1.msra.mxu0 %v1085
        %1112 = vmatprep.subr.mxu0 0.0
        %1113 = vmatpush1.msra.mxu0 %v1086
        %1114 = vmatprep.subr.mxu0 0.0
        %1115 = vmatpush1.msra.mxu0 %v1087
        %1116 = vmatprep.subr.mxu0 0.0
        %1117 = vmatpush1.msra.mxu0 %v1088
        %1118 = vmatprep.subr.mxu0 0.0
        %1119 = vmatpush1.msra.mxu0 %v1089
        %1120 = vmatprep.subr.mxu0 0.0
        %1121 = vmatpush1.msra.mxu0 %v1090
        %1122 = vmatprep.subr.mxu0 0.0
        %1123 = vmatpush1.msra.mxu0 %v1091
        %1124 = vmatprep.subr.mxu0 0.0
        %1125 = vmatpush1.msra.mxu0 0.0
        %1126 = vmatprep.subr.mxu0 0.0
        %1127 = vmatpush1.msra.mxu0 0.0
        %1128 = vmatprep.subr.mxu0 0.0
        %1129 = vmatpush1.msra.mxu0 0.0
        %1130 = vmatprep.subr.mxu0 0.0
        %1131 = vmatpush1.msra.mxu0 0.0
        %1132 = vmatprep.subr.mxu0 0.0
        %1133 = vmatpush1.msra.mxu0 0.0
        %1134 = vmatprep.subr.mxu0 0.0
        %1135 = vmatpush1.msra.mxu0 0.0
        %1136 = vmatprep.subr.mxu0 0.0
        %1137 = vmatpush1.msra.mxu0 0.0
        %1138 = vmatprep.subr.mxu0 0.0
        %1139 = vmatpush1.msra.mxu0 0.0
        %1140 = vmatprep.subr.mxu0 0.0
        %1141 = vmatpush1.msra.mxu0 0.0
        %1142 = vmatprep.subr.mxu0 0.0
        %1143 = vmatpush1.msra.mxu0 0.0
        %1144 = vmatprep.subr.mxu0 0.0
        %1145 = vmatpush1.msra.mxu0 0.0
        %1146 = vmatprep.subr.mxu0 0.0
        %1147 = vmatpush1.msra.mxu0 0.0
        %1148 = vmatprep.subr.mxu0 0.0
        %1149 = vmatpush1.msra.mxu0 0.0
        %1150 = vmatprep.subr.mxu0 0.0
        %1151 = vmatpush1.msra.mxu0 0.0
        %1152 = vmatprep.subr.mxu0 0.0
        %1153 = vmatpush1.msra.mxu0 0.0
        %1154 = vmatprep.subr.mxu0 0.0
        %1155 = vmatpush1.msra.mxu0 0.0
        %1156 = vmatprep.mubr.f32.mxu0 0.0
        %1157 = vmatmul.mubr.f32.gmra.mrb[0].mxu0 %v965
        %v1158 = vpop.f32.mrb[0].mxu0
        %v1159 = vadd.f32 0.0, %v1158
        %v1160 = vpop.f32.mrb[0].mxu0
        %1161 = vmatprep.mubr.f32.mxu0 0.0
        %1162 = vmatmul.mubr.f32.gmra.mrb[0].mxu0 %v966
        %v1163 = vpop.f32.mrb[0].mxu0
        %v1164 = vadd.f32 0.0, %v1163
        %v1165 = vpop.f32.mrb[0].mxu0
        %1166 = vdwg.mxu0
        %v1167 = vrot.slane %v1050, 7
        %v1168 = vrot.slane %v1055, 7
        %v1169 = vsel %vm835, %v1167, %v1168
        %v1170 = vsel %vm835, %v1168, %v1167
        %v1171 = vmul.f32 %v1170, %v841
        %v1172 = vmul.f32 %v1169, %v846
        %1173 = vmatprep.subr.mxu0 0.0
        %1174 = vmatpush1.msra.mxu0 %v1059
        %1175 = vmatprep.subr.mxu0 0.0
        %1176 = vmatpush1.msra.mxu0 %v1060
        %1177 = vmatprep.subr.mxu0 0.0
        %1178 = vmatpush1.msra.mxu0 %v1061
        %1179 = vmatprep.subr.mxu0 0.0
        %1180 = vmatpush1.msra.mxu0 %v1062
        %1181 = vmatprep.subr.mxu0 0.0
        %1182 = vmatpush1.msra.mxu0 %v1063
        %1183 = vmatprep.subr.mxu0 0.0
        %1184 = vmatpush1.msra.mxu0 %v1064
        %1185 = vmatprep.subr.mxu0 0.0
        %1186 = vmatpush1.msra.mxu0 %v1065
        %1187 = vmatprep.subr.mxu0 0.0
        %1188 = vmatpush1.msra.mxu0 %v1066
        %1189 = vmatprep.subr.mxu0 0.0
        %1190 = vmatpush1.msra.mxu0 %v1067
        %1191 = vmatprep.subr.mxu0 0.0
        %1192 = vmatpush1.msra.mxu0 %v1068
        %1193 = vmatprep.subr.mxu0 0.0
        %1194 = vmatpush1.msra.mxu0 %v1069
        %1195 = vmatprep.subr.mxu0 0.0
        %1196 = vmatpush1.msra.mxu0 %v1070
        %1197 = vmatprep.subr.mxu0 0.0
        %1198 = vmatpush1.msra.mxu0 %v1071
        %1199 = vmatprep.subr.mxu0 0.0
        %1200 = vmatpush1.msra.mxu0 %v1072
        %1201 = vmatprep.subr.mxu0 0.0
        %1202 = vmatpush1.msra.mxu0 %v1073
        %1203 = vmatprep.subr.mxu0 0.0
        %1204 = vmatpush1.msra.mxu0 %v1074
        %1205 = vmatprep.subr.mxu0 0.0
        %1206 = vmatpush1.msra.mxu0 0.0
        %1207 = vmatprep.subr.mxu0 0.0
        %1208 = vmatpush1.msra.mxu0 0.0
        %1209 = vmatprep.subr.mxu0 0.0
        %1210 = vmatpush1.msra.mxu0 0.0
        %1211 = vmatprep.subr.mxu0 0.0
        %1212 = vmatpush1.msra.mxu0 0.0
        %1213 = vmatprep.subr.mxu0 0.0
        %1214 = vmatpush1.msra.mxu0 0.0
        %1215 = vmatprep.subr.mxu0 0.0
        %1216 = vmatpush1.msra.mxu0 0.0
        %1217 = vmatprep.subr.mxu0 0.0
        %1218 = vmatpush1.msra.mxu0 0.0
        %1219 = vmatprep.subr.mxu0 0.0
        %1220 = vmatpush1.msra.mxu0 0.0
        %1221 = vmatprep.subr.mxu0 0.0
        %1222 = vmatpush1.msra.mxu0 0.0
        %1223 = vmatprep.subr.mxu0 0.0
        %1224 = vmatpush1.msra.mxu0 0.0
        %1225 = vmatprep.subr.mxu0 0.0
        %1226 = vmatpush1.msra.mxu0 0.0
        %1227 = vmatprep.subr.mxu0 0.0
        %1228 = vmatpush1.msra.mxu0 0.0
        %1229 = vmatprep.subr.mxu0 0.0
        %1230 = vmatpush1.msra.mxu0 0.0
        %1231 = vmatprep.subr.mxu0 0.0
        %1232 = vmatpush1.msra.mxu0 0.0
        %1233 = vmatprep.subr.mxu0 0.0
        %1234 = vmatpush1.msra.mxu0 0.0
        %1235 = vmatprep.subr.mxu0 0.0
        %1236 = vmatpush1.msra.mxu0 0.0
        %1237 = vmatprep.mubr.f32.mxu0 0.0
        %1238 = vmatmul.mubr.f32.gmra.mrb[0].mxu0 %v965
        %v1239 = vpop.f32.mrb[0].mxu0
        %v1240 = vadd.f32 %v1171, %v1239
        %v1241 = vpop.f32.mrb[0].mxu0
        %1242 = vmatprep.mubr.f32.mxu0 0.0
        %1243 = vmatmul.mubr.f32.gmra.mrb[0].mxu0 %v966
        %v1244 = vpop.f32.mrb[0].mxu0
        %v1245 = vadd.f32 %v1172, %v1244
        %v1246 = vpop.f32.mrb[0].mxu0
        %1247 = vdwg.mxu0
        %v1248 = vrot.slane %v1159, 1
        %v1249 = vrot.slane %v1164, 1
        %v1250 = vsel %vm927, %v1248, %v1249
        %v1251 = vsel %vm927, %v1249, %v1248
        %v1252 = vmul.f32 %v1250, %v933
        %v1253 = vmul.f32 %v1251, %v938
        %v1254 = vadd.f32 %v1240, %v1252
        %v1255 = vadd.f32 %v1245, %v1253
        %v1256 = vld [vmem:[#allocation13] sm:$0x1]
        %v1258 = vlaneseq
        %v1259 = vshrl.u32 %v1258, 7
        %v1260 = vsub.s32 0, %v1259
        %v1261 = vrot.slane %v1256, %v1260
        %v1263 = vadd.f32 %v1254, %v1261
        %v1264 = vadd.f32 %v1255, %v1261
        %v1265 = vld [vmem:[#allocation20] sm:$0xff]
        %v1266 = vld [vmem:[#allocation20 + $0x8] sm:$0xff]
        %v1267 = vld [vmem:[#allocation20 + $0x10] sm:$0xff]
        %v1268 = vld [vmem:[#allocation20 + $0x18] sm:$0xff]
        %v1269 = vld [vmem:[#allocation20 + $0x20] sm:$0xff]
        %v1270 = vld [vmem:[#allocation20 + $0x28] sm:$0xff]
        %v1271 = vld [vmem:[#allocation20 + $0x30] sm:$0xff]
        %v1272 = vld [vmem:[#allocation20 + $0x38] sm:$0xff]
        %v1273 = vld [vmem:[#allocation20 + $0x40] sm:$0xff]
        %v1274 = vld [vmem:[#allocation20 + $0x48] sm:$0xff]
        %v1275 = vld [vmem:[#allocation20 + $0x50] sm:$0xff]
        %v1276 = vld [vmem:[#allocation20 + $0x58] sm:$0xff]
        %v1277 = vld [vmem:[#allocation20 + $0x60] sm:$0xff]
        %v1278 = vld [vmem:[#allocation20 + $0x68] sm:$0xff]
        %v1279 = vld [vmem:[#allocation20 + $0x70] sm:$0xff]
        %v1280 = vld [vmem:[#allocation20 + $0x78] sm:$0xff]
        %v1281 = vld [vmem:[#allocation22] sm:$0x1]
        %v1283 = vlaneseq
        %v1284 = vshrl.u32 %v1283, 7
        %v1285 = vsub.s32 0, %v1284
        %v1286 = vrot.slane %v1281, %v1285
        %1288 = vmatprep.subr.mxu0 0.0
        %1289 = vmatpush1.msra.mxu0 %v1265
        %1290 = vmatprep.subr.mxu0 0.0
        %1291 = vmatpush1.msra.mxu0 %v1266
        %1292 = vmatprep.subr.mxu0 0.0
        %1293 = vmatpush1.msra.mxu0 %v1267
        %1294 = vmatprep.subr.mxu0 0.0
        %1295 = vmatpush1.msra.mxu0 %v1268
        %1296 = vmatprep.subr.mxu0 0.0
        %1297 = vmatpush1.msra.mxu0 %v1269
        %1298 = vmatprep.subr.mxu0 0.0
        %1299 = vmatpush1.msra.mxu0 %v1270
        %1300 = vmatprep.subr.mxu0 0.0
        %1301 = vmatpush1.msra.mxu0 %v1271
        %1302 = vmatprep.subr.mxu0 0.0
        %1303 = vmatpush1.msra.mxu0 %v1272
        %1304 = vmatprep.subr.mxu0 0.0
        %1305 = vmatpush1.msra.mxu0 %v1273
        %1306 = vmatprep.subr.mxu0 0.0
        %1307 = vmatpush1.msra.mxu0 %v1274
        %1308 = vmatprep.subr.mxu0 0.0
        %1309 = vmatpush1.msra.mxu0 %v1275
        %1310 = vmatprep.subr.mxu0 0.0
        %1311 = vmatpush1.msra.mxu0 %v1276
        %1312 = vmatprep.subr.mxu0 0.0
        %1313 = vmatpush1.msra.mxu0 %v1277
        %1314 = vmatprep.subr.mxu0 0.0
        %1315 = vmatpush1.msra.mxu0 %v1278
        %1316 = vmatprep.subr.mxu0 0.0
        %1317 = vmatpush1.msra.mxu0 %v1279
        %1318 = vmatprep.subr.mxu0 0.0
        %1319 = vmatpush1.msra.mxu0 %v1280
        %1320 = vmatprep.subr.mxu0 0.0
        %1321 = vmatpush1.msra.mxu0 0.0
        %1322 = vmatprep.subr.mxu0 0.0
        %1323 = vmatpush1.msra.mxu0 0.0
        %1324 = vmatprep.subr.mxu0 0.0
        %1325 = vmatpush1.msra.mxu0 0.0
        %1326 = vmatprep.subr.mxu0 0.0
        %1327 = vmatpush1.msra.mxu0 0.0
        %1328 = vmatprep.subr.mxu0 0.0
        %1329 = vmatpush1.msra.mxu0 0.0
        %1330 = vmatprep.subr.mxu0 0.0
        %1331 = vmatpush1.msra.mxu0 0.0
        %1332 = vmatprep.subr.mxu0 0.0
        %1333 = vmatpush1.msra.mxu0 0.0
        %1334 = vmatprep.subr.mxu0 0.0
        %1335 = vmatpush1.msra.mxu0 0.0
        %1336 = vmatprep.subr.mxu0 0.0
        %1337 = vmatpush1.msra.mxu0 0.0
        %1338 = vmatprep.subr.mxu0 0.0
        %1339 = vmatpush1.msra.mxu0 0.0
        %1340 = vmatprep.subr.mxu0 0.0
        %1341 = vmatpush1.msra.mxu0 0.0
        %1342 = vmatprep.subr.mxu0 0.0
        %1343 = vmatpush1.msra.mxu0 0.0
        %1344 = vmatprep.subr.mxu0 0.0
        %1345 = vmatpush1.msra.mxu0 0.0
        %1346 = vmatprep.subr.mxu0 0.0
        %1347 = vmatpush1.msra.mxu0 0.0
        %1348 = vmatprep.subr.mxu0 0.0
        %1349 = vmatpush1.msra.mxu0 0.0
        %1350 = vmatprep.subr.mxu0 0.0
        %1351 = vmatpush1.msra.mxu0 0.0
        %1352 = vmatprep.mubr.f32.mxu0 0.0
        %1353 = vmatmul.mubr.f32.gmra.mrb[0].mxu0 %v625
        %v1354 = vpop.f32.mrb[0].mxu0
        %v1355 = vadd.f32 %v1286, %v1354
        %v1356 = vpop.f32.mrb[0].mxu0
        %1357 = vmatprep.mubr.f32.mxu0 0.0
        %1358 = vmatmul.mubr.f32.gmra.mrb[0].mxu0 %v626
        %v1359 = vpop.f32.mrb[0].mxu0
        %v1360 = vadd.f32 %v1286, %v1359
        %v1361 = vpop.f32.mrb[0].mxu0
        %1362 = vdwg.mxu0
        %v1363 = vadd.f32 %v1263, %v1264
        %v1364 = vrot.slane %v1363, 4
        %v1365 = vadd.f32 %v1363, %v1364
        %v1366 = vrot.slane %v1365, 2
        %v1367 = vadd.f32 %v1365, %v1366
        %v1368 = vrot.slane %v1367, 1
        %v1369 = vadd.f32 %v1367, %v1368
        %v1370 = vrcp.pop 16.0
        %v1371 = vmul.f32 %v1369, %v1370
        %v1372 = vld [vmem:[#allocation14] sm:$0xff]
        %v1373 = vld [vmem:[#allocation14 + $0x8] sm:$0xff]
        %v1374 = vld [vmem:[#allocation14 + $0x10] sm:$0xff]
        %v1375 = vld [vmem:[#allocation14 + $0x18] sm:$0xff]
        %v1376 = vld [vmem:[#allocation14 + $0x20] sm:$0xff]
        %v1377 = vld [vmem:[#allocation14 + $0x28] sm:$0xff]
        %v1378 = vld [vmem:[#allocation14 + $0x30] sm:$0xff]
        %v1379 = vld [vmem:[#allocation14 + $0x38] sm:$0xff]
        %v1380 = vld [vmem:[#allocation14 + $0x40] sm:$0xff]
        %v1381 = vld [vmem:[#allocation14 + $0x48] sm:$0xff]
        %v1382 = vld [vmem:[#allocation14 + $0x50] sm:$0xff]
        %v1383 = vld [vmem:[#allocation14 + $0x58] sm:$0xff]
        %v1384 = vld [vmem:[#allocation14 + $0x60] sm:$0xff]
        %v1385 = vld [vmem:[#allocation14 + $0x68] sm:$0xff]
        %v1386 = vld [vmem:[#allocation14 + $0x70] sm:$0xff]
        %v1387 = vld [vmem:[#allocation14 + $0x78] sm:$0xff]
        %v1388 = vld [vmem:[#allocation16] sm:$0x1]
        %1389 = vmatprep.subr.mxu0 0.0
        %1390 = vmatpush1.msra.mxu0 %v1372
        %1391 = vmatprep.subr.mxu0 0.0
        %1392 = vmatpush1.msra.mxu0 %v1373
        %1393 = vmatprep.subr.mxu0 0.0
        %1394 = vmatpush1.msra.mxu0 %v1374
        %1395 = vmatprep.subr.mxu0 0.0
        %1396 = vmatpush1.msra.mxu0 %v1375
        %1397 = vmatprep.subr.mxu0 0.0
        %1398 = vmatpush1.msra.mxu0 %v1376
        %1399 = vmatprep.subr.mxu0 0.0
        %1400 = vmatpush1.msra.mxu0 %v1377
        %1401 = vmatprep.subr.mxu0 0.0
        %1402 = vmatpush1.msra.mxu0 %v1378
        %1403 = vmatprep.subr.mxu0 0.0
        %1404 = vmatpush1.msra.mxu0 %v1379
        %1405 = vmatprep.subr.mxu0 0.0
        %1406 = vmatpush1.msra.mxu0 %v1380
        %1407 = vmatprep.subr.mxu0 0.0
        %1408 = vmatpush1.msra.mxu0 %v1381
        %1409 = vmatprep.subr.mxu0 0.0
        %1410 = vmatpush1.msra.mxu0 %v1382
        %1411 = vmatprep.subr.mxu0 0.0
        %1412 = vmatpush1.msra.mxu0 %v1383
        %1413 = vmatprep.subr.mxu0 0.0
        %1414 = vmatpush1.msra.mxu0 %v1384
        %1415 = vmatprep.subr.mxu0 0.0
        %1416 = vmatpush1.msra.mxu0 %v1385
        %1417 = vmatprep.subr.mxu0 0.0
        %1418 = vmatpush1.msra.mxu0 %v1386
        %1419 = vmatprep.subr.mxu0 0.0
        %1420 = vmatpush1.msra.mxu0 %v1387
        %1421 = vmatprep.subr.mxu0 0.0
        %1422 = vmatpush1.msra.mxu0 0.0
        %1423 = vmatprep.subr.mxu0 0.0
        %1424 = vmatpush1.msra.mxu0 0.0
        %1425 = vmatprep.subr.mxu0 0.0
        %1426 = vmatpush1.msra.mxu0 0.0
        %1427 = vmatprep.subr.mxu0 0.0
        %1428 = vmatpush1.msra.mxu0 0.0
        %1429 = vmatprep.subr.mxu0 0.0
        %1430 = vmatpush1.msra.mxu0 0.0
        %1431 = vmatprep.subr.mxu0 0.0
        %1432 = vmatpush1.msra.mxu0 0.0
        %1433 = vmatprep.subr.mxu0 0.0
        %1434 = vmatpush1.msra.mxu0 0.0
        %1435 = vmatprep.subr.mxu0 0.0
        %1436 = vmatpush1.msra.mxu0 0.0
        %1437 = vmatprep.subr.mxu0 0.0
        %1438 = vmatpush1.msra.mxu0 0.0
        %1439 = vmatprep.subr.mxu0 0.0
        %1440 = vmatpush1.msra.mxu0 0.0
        %1441 = vmatprep.subr.mxu0 0.0
        %1442 = vmatpush1.msra.mxu0 0.0
        %1443 = vmatprep.subr.mxu0 0.0
        %1444 = vmatpush1.msra.mxu0 0.0
        %1445 = vmatprep.subr.mxu0 0.0
        %1446 = vmatpush1.msra.mxu0 0.0
        %1447 = vmatprep.subr.mxu0 0.0
        %1448 = vmatpush1.msra.mxu0 0.0
        %1449 = vmatprep.subr.mxu0 0.0
        %1450 = vmatpush1.msra.mxu0 0.0
        %1451 = vmatprep.subr.mxu0 0.0
        %1452 = vmatpush1.msra.mxu0 0.0
        %1453 = vmatprep.mubr.f32.mxu0 0.0
        %1454 = vmatmul.mubr.f32.gmra.mrb[0].mxu0 %v1371
        %v1455 = vpop.f32.mrb[0].mxu0
        %v1456 = vadd.f32 %v1388, %v1455
        %v1457 = vpop.f32.mrb[0].mxu0
        %1458 = vdwg.mxu0
        %v1459 = vmax.f32 %v1456, 0.0
        %v1460 = vld [vmem:[#allocation17] sm:$0xff]
        %v1461 = vld [vmem:[#allocation17 + $0x8] sm:$0xff]
        %v1462 = vld [vmem:[#allocation17 + $0x10] sm:$0xff]
        %v1463 = vld [vmem:[#allocation17 + $0x18] sm:$0xff]
        %v1464 = vld [vmem:[#allocation17 + $0x20] sm:$0xff]
        %v1465 = vld [vmem:[#allocation17 + $0x28] sm:$0xff]
        %v1466 = vld [vmem:[#allocation17 + $0x30] sm:$0xff]
        %v1467 = vld [vmem:[#allocation17 + $0x38] sm:$0xff]
        %v1468 = vld [vmem:[#allocation17 + $0x40] sm:$0xff]
        %v1469 = vld [vmem:[#allocation17 + $0x48] sm:$0xff]
        %v1470 = vld [vmem:[#allocation17 + $0x50] sm:$0xff]
        %v1471 = vld [vmem:[#allocation17 + $0x58] sm:$0xff]
        %v1472 = vld [vmem:[#allocation17 + $0x60] sm:$0xff]
        %v1473 = vld [vmem:[#allocation17 + $0x68] sm:$0xff]
        %v1474 = vld [vmem:[#allocation17 + $0x70] sm:$0xff]
        %v1475 = vld [vmem:[#allocation17 + $0x78] sm:$0xff]
        %v1476 = vld [vmem:[#allocation19] sm:$0x1]
        %1477 = vmatprep.subr.mxu0 0.0
        %1478 = vmatpush1.msra.mxu0 %v1460
        %1479 = vmatprep.subr.mxu0 0.0
        %1480 = vmatpush1.msra.mxu0 %v1461
        %1481 = vmatprep.subr.mxu0 0.0
        %1482 = vmatpush1.msra.mxu0 %v1462
        %1483 = vmatprep.subr.mxu0 0.0
        %1484 = vmatpush1.msra.mxu0 %v1463
        %1485 = vmatprep.subr.mxu0 0.0
        %1486 = vmatpush1.msra.mxu0 %v1464
        %1487 = vmatprep.subr.mxu0 0.0
        %1488 = vmatpush1.msra.mxu0 %v1465
        %1489 = vmatprep.subr.mxu0 0.0
        %1490 = vmatpush1.msra.mxu0 %v1466
        %1491 = vmatprep.subr.mxu0 0.0
        %1492 = vmatpush1.msra.mxu0 %v1467
        %1493 = vmatprep.subr.mxu0 0.0
        %1494 = vmatpush1.msra.mxu0 %v1468
        %1495 = vmatprep.subr.mxu0 0.0
        %1496 = vmatpush1.msra.mxu0 %v1469
        %1497 = vmatprep.subr.mxu0 0.0
        %1498 = vmatpush1.msra.mxu0 %v1470
        %1499 = vmatprep.subr.mxu0 0.0
        %1500 = vmatpush1.msra.mxu0 %v1471
        %1501 = vmatprep.subr.mxu0 0.0
        %1502 = vmatpush1.msra.mxu0 %v1472
        %1503 = vmatprep.subr.mxu0 0.0
        %1504 = vmatpush1.msra.mxu0 %v1473
        %1505 = vmatprep.subr.mxu0 0.0
        %1506 = vmatpush1.msra.mxu0 %v1474
        %1507 = vmatprep.subr.mxu0 0.0
        %1508 = vmatpush1.msra.mxu0 %v1475
        %1509 = vmatprep.subr.mxu0 0.0
        %1510 = vmatpush1.msra.mxu0 0.0
        %1511 = vmatprep.subr.mxu0 0.0
        %1512 = vmatpush1.msra.mxu0 0.0
        %1513 = vmatprep.subr.mxu0 0.0
        %1514 = vmatpush1.msra.mxu0 0.0
        %1515 = vmatprep.subr.mxu0 0.0
        %1516 = vmatpush1.msra.mxu0 0.0
        %1517 = vmatprep.subr.mxu0 0.0
        %1518 = vmatpush1.msra.mxu0 0.0
        %1519 = vmatprep.subr.mxu0 0.0
        %1520 = vmatpush1.msra.mxu0 0.0
        %1521 = vmatprep.subr.mxu0 0.0
        %1522 = vmatpush1.msra.mxu0 0.0
        %1523 = vmatprep.subr.mxu0 0.0
        %1524 = vmatpush1.msra.mxu0 0.0
        %1525 = vmatprep.subr.mxu0 0.0
        %1526 = vmatpush1.msra.mxu0 0.0
        %1527 = vmatprep.subr.mxu0 0.0
        %1528 = vmatpush1.msra.mxu0 0.0
        %1529 = vmatprep.subr.mxu0 0.0
        %1530 = vmatpush1.msra.mxu0 0.0
        %1531 = vmatprep.subr.mxu0 0.0
        %1532 = vmatpush1.msra.mxu0 0.0
        %1533 = vmatprep.subr.mxu0 0.0
        %1534 = vmatpush1.msra.mxu0 0.0
        %1535 = vmatprep.subr.mxu0 0.0
        %1536 = vmatpush1.msra.mxu0 0.0
        %1537 = vmatprep.subr.mxu0 0.0
        %1538 = vmatpush1.msra.mxu0 0.0
        %1539 = vmatprep.subr.mxu0 0.0
        %1540 = vmatpush1.msra.mxu0 0.0
        %1541 = vmatprep.mubr.f32.mxu0 0.0
        %1542 = vmatmul.mubr.f32.gmra.mrb[0].mxu0 %v1459
        %v1543 = vpop.f32.mrb[0].mxu0
        %v1544 = vadd.f32 %v1476, %v1543
        %v1545 = vpop.f32.mrb[0].mxu0
        %1546 = vdwg.mxu0
        %v1547 = vxor.u32 %v1544, 2147483648
        %v1548 = vmul.f32 %v1547, 1.442695
        %v1549 = vpow.pop %v1548
        %v1550 = vadd.f32 %v1549, 1.0
        %v1551 = vrcp.pop %v1550
        %v1552 = vmul.f32 1.0, %v1551
        %v1553 = vlaneseq
        %v1554 = vshrl.u32 %v1553, 7
        %v1555 = vsub.s32 0, %v1554
        %v1556 = vrot.slane %v1552, %v1555
        %v1557 = vmul.f32 %v1263, %v1556
        %v1558 = vmul.f32 %v1264, %v1556
        %v1559 = vadd.f32 %v1557, %v1355
        %v1560 = vadd.f32 %v1558, %v1360
        %v1561 = vxor.u32 %v1559, 2147483648
        %v1562 = vxor.u32 %v1560, 2147483648
        %v1563 = vmul.f32 %v1561, 1.442695
        %v1564 = vpow.pop %v1563
        %v1565 = vmul.f32 %v1562, 1.442695
        %v1566 = vpow.pop %v1565
        %v1567 = vadd.f32 %v1564, 1.0
        %v1568 = vadd.f32 %v1566, 1.0
        %v1569 = vrcp.pop %v1567
        %v1570 = vmul.f32 1.0, %v1569
        %v1571 = vrcp.pop %v1568
        %v1572 = vmul.f32 1.0, %v1571
        %v1573 = vmul.f32 %v1559, %v1570
        %v1574 = vmul.f32 %v1560, %v1572
        %1575 = vst [vmem:[%s622] sm:$0xff] %v1573
        %1576 = vst [vmem:[%s622 + $0x8] sm:$0xff] %v1574
        %s1577 = sand.u32 %s322, 1
        %s1578 = scalar_lea.sflag [#allocation4], %s1577
        %s1579 = sand.u32 %s322, 1
        %s1580 = smul.addr %s1579, 16
        %s1581 = scalar_lea.vmem [#allocation23], %s1580
        // Predicated region
        $region125: #{tpu_custom_call.1} parent=71 // pred_check
          %p1582 = pneg %p332
        $region126: #{tpu_custom_call.1} parent=71 // pred_check_branch
          %1584 = sbr.rel (%p1582) target = $region128
        $region127: #{tpu_custom_call.1} parent=71 // pred_region
          %s1585 = smul.u32 2, %s36
          %s1587 = ssub.s32 256, 256
          %1588 = vsyncadd %s1578, %s1587
          %s1589 = smul.addr %s1585, 128
          %s1590 = scalar_lea.hbm %s13, %s1589
          %s1591 = sshll.u32 %s1581, 4
          %s1592 = int_to_ptr.vmem [resolvable:$true] %s1591
          %1597 = dma.vmem_to_hbm [thread:$0]  %s1592, 256, %s1590, %s1578, 128, 128, 8
        $region128: #{tpu_custom_call.1} parent=71 // pred_fallthru
          _
      $region72: #{tpu_custom_call.1} parent=5 // pred_fallthru
        _
      %p1598 = scmp.le.s32.totalorder 2, %s31
      // Predicated region
      $region129: #{tpu_custom_call.1} parent=5 // pred_check
        %p1599 = pneg %p1598
      $region130: #{tpu_custom_call.1} parent=5 // pred_check_branch
        %1601 = sbr.rel (%p1599) target = $region132
      $region131: #{tpu_custom_call.1} parent=5 // pred_region
        %s1602 = ssub.s32 %s31, 2
        // Predicated region
        $region133: #{tpu_custom_call.1} parent=131 // pred_check
          %p1603 = pneg %p338
        $region134: #{tpu_custom_call.1} parent=131 // pred_check_branch
          %1605 = sbr.rel (%p1603) target = $region136
        $region135: #{tpu_custom_call.1} parent=131 // pred_region
          %s1606 = sand.u32 %s323, 1
          %s1607 = scalar_lea.sflag [#allocation4], %s1606
          %s1608 = sand.u32 %s323, 1
          %s1609 = smul.addr %s1608, 16
          %s1610 = scalar_lea.vmem [#allocation23], %s1609
          %1611 = dma.done %s1607, 256
        $region136: #{tpu_custom_call.1} parent=131 // pred_fallthru
          _
      $region132: #{tpu_custom_call.1} parent=5 // pred_fallthru
        _
    $region6: #{tpu_custom_call.1} parent=1 // loop_footer
      %s35 = sadd.s32 1, %s31
    $region7: #{tpu_custom_call.1} parent=1 // loop_footer_branch
      %30 = sbr.rel target = $region3
    $region8: #{tpu_custom_call.1} parent=1 // loop_exit
      _
    %1612 = vsyncpa [#allocation3], 1
    %s1613 = scalar_lea.sflag [#allocation3], 1
    %1614 = vsyncpa %s1613, 1
    %1615 = vsyncpa [#allocation6], 1
    %1616 = vsyncpa [#allocation9], 1
    %1617 = vsyncpa [#allocation12], 1
    %1618 = vsyncpa [#allocation15], 1
    %1619 = vsyncpa [#allocation18], 1
    %1620 = vsyncpa [#allocation21], 1
    %1621 = vsyncpa [#allocation4], 1
    %s1622 = scalar_lea.sflag [#allocation4], 1
    %1623 = vsyncpa %s1622, 1

</llo_original>
